<compile_context>
chip_gen: v6e
topology: v6e:2x2x1
jax: 0.10.0
libtpu: 0.0.40
codegen_flags: <defaults>
</compile_context>

<pallas_src>
import functools

import jax
import jax.numpy as jnp
from jax import lax
from jax.experimental import pallas as pl
from jax.experimental.pallas import tpu as pltpu

EPS = 1e-5        # PyTorch nn.LayerNorm default
NEG_BIG = -1e30   # finite "-inf" for the running max


def _light_group_attn_kernel(num_heads, head_dim,
                             qt_ref, k_ref, v_ref, bias_ref,
                             gk_ref, bk_ref, gv_ref, bv_ref,
                             o_ref,
                             m_sc, l_sc, acc_sc):
    kv_idx = pl.program_id(1)
    num_kv = pl.num_programs(1)
    hnq = qt_ref.shape[1]                 # H * Nq
    nq = hnq // num_heads

    # ---------------------------------------------------------------- kv == 0
    @pl.when(kv_idx == 0)
    def _init():
        m_sc[...] = jnp.full(m_sc.shape, NEG_BIG, jnp.float32)
        l_sc[...] = jnp.zeros(l_sc.shape, jnp.float32)
        acc_sc[...] = jnp.zeros(acc_sc.shape, jnp.float32)

    # ------------------------------------------------------- per-kv-tile work
    # LayerNorm(key): lane-dense on [TNk, C], centered two-pass form, f32 math.
    k_in = k_ref[0].astype(jnp.float32)
    mu_k = jnp.mean(k_in, axis=-1, keepdims=True)
    kc = k_in - mu_k
    var_k = jnp.mean(kc * kc, axis=-1, keepdims=True)
    kn = (kc * lax.rsqrt(var_k + EPS) * gk_ref[...].astype(jnp.float32)
          + bk_ref[...].astype(jnp.float32)).astype(jnp.bfloat16)

    # LayerNorm(value): lane-dense on [TNk, C], computed once per tile.
    v_in = v_ref[0].astype(jnp.float32)
    mu_v = jnp.mean(v_in, axis=-1, keepdims=True)
    vc = v_in - mu_v
    var_v = jnp.mean(vc * vc, axis=-1, keepdims=True)
    vn = (vc * lax.rsqrt(var_v + EPS) * gv_ref[...].astype(jnp.float32)
          + bv_ref[...].astype(jnp.float32)).astype(jnp.bfloat16)

    # Fused scores for ALL heads: one MXU call with M = H*Nq (bf16 operands,
    # f32 accumulate).  Row h*Nq + n of q~ corresponds to (head h, query n).
    dim_nums = (((1,), (1,)), ((), ()))                       # contract last dims
    scores = lax.dot_general(qt_ref[0], kn, dim_nums,
                             preferred_element_type=jnp.float32)
    bias = jnp.tile(bias_ref[0].astype(jnp.float32), (num_heads, 1))
    scores = scores + bias                                    # [H*Nq, TNk]

    # Flash-style online softmax, one lane-dense pass over the fused tensor.
    m_prev = m_sc[...]                                        # [H*Nq, 1]
    m_new = jnp.maximum(m_prev, jnp.max(scores, axis=-1, keepdims=True))
    alpha = jnp.exp(m_prev - m_new)
    p = jnp.exp(scores - m_new)                               # unnormalized, f32
    l_sc[...] = alpha * l_sc[...] + jnp.sum(p, axis=-1, keepdims=True)
    m_sc[...] = m_new

    # Rescale the whole accumulator once, then add the small per-head p @ v.
    acc_sc[...] = alpha * acc_sc[...]
    p_bf = p.astype(jnp.bfloat16)
    for h in range(num_heads):
        acc_sc[h * nq:(h + 1) * nq, :] += jnp.dot(
            p_bf[h * nq:(h + 1) * nq, :],
            vn[:, h * head_dim:(h + 1) * head_dim],
            preferred_element_type=jnp.float32)

    # -------------------------------------------------------------- last step
    @pl.when(kv_idx == num_kv - 1)
    def _finalize():
        # Deferred softmax normalization; exact reciprocal (once per batch).
        inv_l = pl.reciprocal(l_sc[...], approx=False)        # [H*Nq, 1]
        o_ref[0] = (acc_sc[...] * inv_l).astype(o_ref.dtype)


def light_group_attn_block(query, key, value, att_bias, params, *,
                           num_heads, kv_tile=None):
    """query [B,Nq,C], key [B,Nk,C], value [B,Nk,C], att_bias [B,Nq,Nk]."""
    B, Nq, C = query.shape
    _, Nk, _ = key.shape
    assert C % num_heads == 0
    H = num_heads
    hd = C // H
    scale = hd ** (-0.5)

    if kv_tile is None:
        kv_tile = Nk if Nk <= 1024 else 1024
    assert Nk % kv_tile == 0, "Nk must be divisible by kv_tile"
    num_kv = Nk // kv_tile

    # ---- wrapper-side prep (XLA): query LayerNorm (scale folded into gamma AND
    # beta) and the k-projection folded onto the small query side as ONE einsum.
    #   q~_h = (LN(q)_h * scale) @ Wk[h*hd:(h+1)*hd, :]          -> [B, H, Nq, C]
    def _ln(x, g, b):
        mu = jnp.mean(x, axis=-1, keepdims=True)
        xc = x - mu
        var = jnp.mean(xc * xc, axis=-1, keepdims=True)
        return xc * lax.rsqrt(var + EPS) * g + b

    qn = _ln(query.astype(jnp.float32),
             params["gq"].astype(jnp.float32) * scale,
             params["bq"].astype(jnp.float32) * scale)          # [B, Nq, C]
    wk_heads = params["wk"].astype(jnp.float32).reshape(H, hd, C)
    qt = jnp.einsum("bnhd,hdc->bhnc", qn.reshape(B, Nq, H, hd), wk_heads)
    qt = qt.reshape(B, H * Nq, C).astype(jnp.bfloat16)          # [B, H*Nq, C]

    # Stream the big operands in bf16 (kernel is HBM-bound; math stays f32).
    key_bf = key.astype(jnp.bfloat16)
    value_bf = value.astype(jnp.bfloat16)
    bias_bf = att_bias.astype(jnp.bfloat16)

    gk = params["gk"].reshape(1, C).astype(jnp.float32)
    bk = params["bk"].reshape(1, C).astype(jnp.float32)
    gv = params["gv"].reshape(1, C).astype(jnp.float32)
    bv = params["bv"].reshape(1, C).astype(jnp.float32)

    kernel = functools.partial(_light_group_attn_kernel, H, hd)

    # ---- advisory cost estimate.
    flops = int(2 * B * H * Nq * Nk * C            # fused scores
                + 2 * B * H * Nq * Nk * hd         # p @ v
                + 20 * B * Nk * C)                 # key / value LayerNorms
    transcendentals = int(B * H * Nq * (Nk + num_kv))
    bytes_accessed = int(2 * (B * Nk * C * 2 + B * Nq * Nk + B * H * Nq * C)
                         + 4 * B * H * Nq * hd + 4 * 4 * C)

    # ---- explicit VMEM budget (double-buffered streams + constants + scratch
    # + headroom for the f32 score/p temporaries).  v7x has 64 MiB physical.
    lane = 128
    pad = lambda x: ((x + lane - 1) // lane) * lane
    stream = 2 * (kv_tile * pad(C) * 2 * 2 + Nq * pad(kv_tile) * 2)
    consts = 2 * (H * Nq * pad(C) * 2 + H * Nq * pad(hd) * 4) + 4 * 8 * pad(C) * 4
    scratch = 3 * H * Nq * lane * 4
    temps = 8 * H * Nq * pad(kv_tile) * 4
    vmem_limit = min(max(stream + consts + scratch + temps + (4 << 20),
                         32 << 20), 64 << 20)

    grid_spec = pltpu.PrefetchScalarGridSpec(
        num_scalar_prefetch=0,
        grid=(B, num_kv),
        in_specs=[
            pl.BlockSpec((1, H * Nq, C),   lambda b, kv: (b, 0, 0)),    # q~ (bf16, kv-invariant)
            pl.BlockSpec((1, kv_tile, C),  lambda b, kv: (b, kv, 0)),   # key tile (bf16)
            pl.BlockSpec((1, kv_tile, C),  lambda b, kv: (b, kv, 0)),   # value tile (bf16, channel-major)
            pl.BlockSpec((1, Nq, kv_tile), lambda b, kv: (b, 0, kv)),   # att_bias tile (bf16)
            pl.BlockSpec((1, C),           lambda b, kv: (0, 0)),       # gamma_k
            pl.BlockSpec((1, C),           lambda b, kv: (0, 0)),       # beta_k
            pl.BlockSpec((1, C),           lambda b, kv: (0, 0)),       # gamma_v
            pl.BlockSpec((1, C),           lambda b, kv: (0, 0)),       # beta_v
        ],
        # Head-major-flat output (single lane-dense store per batch); the tiny
        # transpose back to [B, Nq, C] is done by XLA below.
        out_specs=pl.BlockSpec((1, H * Nq, hd), lambda b, kv: (b, 0, 0)),
        scratch_shapes=[
            pltpu.VMEM((H * Nq, 1), jnp.float32),    # running max
            pltpu.VMEM((H * Nq, 1), jnp.float32),    # running sum
            pltpu.VMEM((H * Nq, hd), jnp.float32),   # output accumulator
        ],
    )

    # TODO(synk): on v7x with B == 1 (odd B), a second "parallel" grid axis over
    # query/head groups would engage both TensorCores; omitted here since it
    # duplicates the key/bias HBM stream per group on this memory-bound kernel.
    out_flat = pl.pallas_call(
        kernel,
        out_shape=jax.ShapeDtypeStruct((B, H * Nq, hd), query.dtype),
        grid_spec=grid_spec,
        compiler_params=pltpu.CompilerParams(
            dimension_semantics=("parallel", "arbitrary"),
            vmem_limit_bytes=int(vmem_limit)),
        cost_estimate=pl.CostEstimate(flops=flops,
                                      transcendentals=transcendentals,
                                      bytes_accessed=bytes_accessed),
    )(qt, key_bf, value_bf, bias_bf, gk, bk, gv, bv)

    # [B, H*Nq, hd] -> [B, Nq, H*hd]  (tiny, done by XLA).
    return out_flat.reshape(B, H, Nq, hd).transpose(0, 2, 1, 3).reshape(B, Nq, C)


def reference_forward(query, key, value, att_bias, params, *, num_heads):
    """Pure-JAX f32 reference mirroring the PyTorch forward."""
    def ln(x, g, b):
        mu = x.mean(-1, keepdims=True)
        var = ((x - mu) ** 2).mean(-1, keepdims=True)
        return (x - mu) / jnp.sqrt(var + EPS) * g + b

    q = ln(query, params["gq"], params["bq"])
    k = ln(key, params["gk"], params["bk"])
    v = ln(value, params["gv"], params["bv"])
    k = k @ params["wk"].T                                   # Linear, no bias

    B, Nq, C = q.shape
    Nk = k.shape[1]
    H = num_heads
    hd = C // H
    scale = hd ** (-0.5)

    qh = q.reshape(B, Nq, H, hd).transpose(0, 2, 1, 3)
    kh = k.reshape(B, Nk, H, hd).transpose(0, 2, 1, 3)
    vh = v.reshape(B, Nk, H, hd).transpose(0, 2, 1, 3)

    attn = jnp.einsum("bhqc,bhkc->bhqk", qh, kh) * scale
    attn = attn + att_bias[:, None]                          # unsqueeze(dim=1)
    attn = jax.nn.softmax(attn, axis=-1)
    out = jnp.einsum("bhqk,bhkc->bhqc", attn, vh)
    return out.transpose(0, 2, 1, 3).reshape(B, Nq, C)


if __name__ == "__main__":
    # Small but tiling-friendly shapes: 2 kv tiles exercise the online softmax.
    B, Nq, Nk, C, H = 2, 16, 256, 64, 4
    KV_TILE = 128

    rng = jax.random.PRNGKey(0)
    ks = jax.random.split(rng, 12)

    query = jax.random.normal(ks[0], (B, Nq, C), jnp.float32)
    key_ = jax.random.normal(ks[1], (B, Nk, C), jnp.float32)
    value = jax.random.normal(ks[2], (B, Nk, C), jnp.float32)
    att_bias = 0.1 * jax.random.normal(ks[3], (B, Nq, Nk), jnp.float32)

    params = {
        "gq": 1.0 + 0.05 * jax.random.normal(ks[4], (C,), jnp.float32),
        "bq": 0.05 * jax.random.normal(ks[5], (C,), jnp.float32),
        "gk": 1.0 + 0.05 * jax.random.normal(ks[6], (C,), jnp.float32),
        "bk": 0.05 * jax.random.normal(ks[7], (C,), jnp.float32),
        "gv": 1.0 + 0.05 * jax.random.normal(ks[8], (C,), jnp.float32),
        "bv": 0.05 * jax.random.normal(ks[9], (C,), jnp.float32),
        # k_proj Linear weight, PyTorch layout [out_features, in_features].
        "wk": (1.0 / jnp.sqrt(C)) * jax.random.normal(ks[10], (C, C), jnp.float32),
    }

    out = light_group_attn_block(query, key_, value, att_bias, params,
                                 num_heads=H, kv_tile=KV_TILE)
    out = jax.block_until_ready(out)

    ref = reference_forward(query, key_, value, att_bias, params, num_heads=H)
    assert out.shape == (B, Nq, C)
    max_err = float(jnp.max(jnp.abs(out - ref)))
    # bf16-streamed inputs + bf16 MXU operands -> relaxed but bug-catching tol.
    assert max_err < 5e-2, f"Pallas kernel mismatch, max abs err = {max_err}"

    print("KERNEL_OK")
</pallas_src>

<mosaic_0001>
module attributes {stable_mosaic.version = 11 : i64} {
  func.func @_light_group_attn_kernel(%arg0: i32, %arg1: i32, %arg2: memref<1x64x64xbf16, #tpu.memory_space<vmem>>, %arg3: memref<1x128x64xbf16, #tpu.memory_space<vmem>>, %arg4: memref<1x128x64xbf16, #tpu.memory_space<vmem>>, %arg5: memref<1x16x128xbf16, #tpu.memory_space<vmem>>, %arg6: memref<1x64xf32, #tpu.memory_space<vmem>>, %arg7: memref<1x64xf32, #tpu.memory_space<vmem>>, %arg8: memref<1x64xf32, #tpu.memory_space<vmem>>, %arg9: memref<1x64xf32, #tpu.memory_space<vmem>>, %arg10: memref<1x64x16xf32, #tpu.memory_space<vmem>>, %arg11: memref<64x1xf32, #tpu.memory_space<vmem>>, %arg12: memref<64x1xf32, #tpu.memory_space<vmem>>, %arg13: memref<64x16xf32, #tpu.memory_space<vmem>>) attributes {dimension_semantics = [#tpu.dimension_semantics<parallel>, #tpu.dimension_semantics<arbitrary>], iteration_bounds = array<i64: 2, 2>, scalar_prefetch = 0 : i64, scratch_operands = 3 : i64, tpu.core_type = #tpu.core_type<tc>, window_params = [{transform_indices = @transform_0, window_bounds = array<i64: 1, 64, 64>}, {transform_indices = @transform_1, window_bounds = array<i64: 1, 128, 64>}, {transform_indices = @transform_2, window_bounds = array<i64: 1, 128, 64>}, {transform_indices = @transform_3, window_bounds = array<i64: 1, 16, 128>}, {pipeline_mode = #tpu.pipeline_mode<synchronous>, transform_indices = @transform_4, window_bounds = array<i64: 1, 64>}, {pipeline_mode = #tpu.pipeline_mode<synchronous>, transform_indices = @transform_5, window_bounds = array<i64: 1, 64>}, {pipeline_mode = #tpu.pipeline_mode<synchronous>, transform_indices = @transform_6, window_bounds = array<i64: 1, 64>}, {pipeline_mode = #tpu.pipeline_mode<synchronous>, transform_indices = @transform_7, window_bounds = array<i64: 1, 64>}, {transform_indices = @transform_8, window_bounds = array<i64: 1, 64, 16>}]} {
    %c0_i32 = arith.constant 0 : i32
    %0 = arith.cmpi eq, %arg1, %c0_i32 : i32
    %1 = arith.extui %0 : i1 to i32
    %c0_i32_0 = arith.constant 0 : i32
    %2 = arith.cmpi ne, %1, %c0_i32_0 : i32
    scf.if %2 {
      %cst_62 = arith.constant -1.000000e+30 : f32
      %111 = vector.broadcast %cst_62 : f32 to vector<64x1xf32>
      %c0_63 = arith.constant 0 : index
      %c0_64 = arith.constant 0 : index
      %112 = vector.load %arg11[%c0_63, %c0_64] : memref<64x1xf32, #tpu.memory_space<vmem>>, vector<64x1xf32>
      tpu.vector_store %arg11[%c0_63, %c0_64], %111 {strides = array<i32>} : memref<64x1xf32, #tpu.memory_space<vmem>>, vector<64x1xf32>,
      %cst_65 = arith.constant 0.000000e+00 : f32
      %113 = vector.broadcast %cst_65 : f32 to vector<64x1xf32>
      %c0_66 = arith.constant 0 : index
      %c0_67 = arith.constant 0 : index
      %114 = vector.load %arg12[%c0_66, %c0_67] : memref<64x1xf32, #tpu.memory_space<vmem>>, vector<64x1xf32>
      tpu.vector_store %arg12[%c0_66, %c0_67], %113 {strides = array<i32>} : memref<64x1xf32, #tpu.memory_space<vmem>>, vector<64x1xf32>,
      %cst_68 = arith.constant 0.000000e+00 : f32
      %115 = vector.broadcast %cst_68 : f32 to vector<64x16xf32>
      %c0_69 = arith.constant 0 : index
      %c0_70 = arith.constant 0 : index
      %116 = vector.load %arg13[%c0_69, %c0_70] : memref<64x16xf32, #tpu.memory_space<vmem>>, vector<64x16xf32>
      tpu.vector_store %arg13[%c0_69, %c0_70], %115 {strides = array<i32>} : memref<64x16xf32, #tpu.memory_space<vmem>>, vector<64x16xf32>,
    } else {
    }
    %c0 = arith.constant 0 : index
    %c0_1 = arith.constant 0 : index
    %c0_2 = arith.constant 0 : index
    %3 = vector.load %arg3[%c0, %c0_1, %c0_2] : memref<1x128x64xbf16, #tpu.memory_space<vmem>>, vector<1x128x64xbf16>
    %4 = vector.shape_cast %3 : vector<1x128x64xbf16> to vector<128x64xbf16>
    %5 = arith.extf %4 : vector<128x64xbf16> to vector<128x64xf32>
    %cst = arith.constant dense<0.000000e+00> : vector<128xf32>
    %6 = vector.multi_reduction <add>, %5, %cst [1] : vector<128x64xf32> to vector<128xf32>
    %7 = vector.shape_cast %6 : vector<128xf32> to vector<128x1xf32>
    %cst_3 = arith.constant 6.400000e+01 : f32
    %8 = vector.broadcast %cst_3 : f32 to vector<128x1xf32>
    %9 = arith.divf %7, %8 : vector<128x1xf32>
    %10 = vector.broadcast %9 : vector<128x1xf32> to vector<128x64xf32>
    %11 = arith.subf %5, %10 : vector<128x64xf32>
    %12 = arith.mulf %11, %11 : vector<128x64xf32>
    %cst_4 = arith.constant dense<0.000000e+00> : vector<128xf32>
    %13 = vector.multi_reduction <add>, %12, %cst_4 [1] : vector<128x64xf32> to vector<128xf32>
    %14 = vector.shape_cast %13 : vector<128xf32> to vector<128x1xf32>
    %cst_5 = arith.constant 6.400000e+01 : f32
    %15 = vector.broadcast %cst_5 : f32 to vector<128x1xf32>
    %16 = arith.divf %14, %15 : vector<128x1xf32>
    %cst_6 = arith.constant 9.99999974E-6 : f32
    %17 = vector.broadcast %cst_6 : f32 to vector<128x1xf32>
    %18 = arith.addf %16, %17 : vector<128x1xf32>
    %19 = math.rsqrt %18 : vector<128x1xf32>
    %20 = vector.broadcast %19 : vector<128x1xf32> to vector<128x64xf32>
    %21 = arith.mulf %11, %20 : vector<128x64xf32>
    %c0_7 = arith.constant 0 : index
    %c0_8 = arith.constant 0 : index
    %22 = vector.load %arg6[%c0_7, %c0_8] : memref<1x64xf32, #tpu.memory_space<vmem>>, vector<1x64xf32>
    %23 = vector.broadcast %22 : vector<1x64xf32> to vector<128x64xf32>
    %24 = arith.mulf %21, %23 : vector<128x64xf32>
    %c0_9 = arith.constant 0 : index
    %c0_10 = arith.constant 0 : index
    %25 = vector.load %arg7[%c0_9, %c0_10] : memref<1x64xf32, #tpu.memory_space<vmem>>, vector<1x64xf32>
    %26 = vector.broadcast %25 : vector<1x64xf32> to vector<128x64xf32>
    %27 = arith.addf %24, %26 : vector<128x64xf32>
    %28 = arith.truncf %27 : vector<128x64xf32> to vector<128x64xbf16>
    %c0_11 = arith.constant 0 : index
    %c0_12 = arith.constant 0 : index
    %c0_13 = arith.constant 0 : index
    %29 = vector.load %arg4[%c0_11, %c0_12, %c0_13] : memref<1x128x64xbf16, #tpu.memory_space<vmem>>, vector<1x128x64xbf16>
    %30 = vector.shape_cast %29 : vector<1x128x64xbf16> to vector<128x64xbf16>
    %31 = arith.extf %30 : vector<128x64xbf16> to vector<128x64xf32>
    %cst_14 = arith.constant dense<0.000000e+00> : vector<128xf32>
    %32 = vector.multi_reduction <add>, %31, %cst_14 [1] : vector<128x64xf32> to vector<128xf32>
    %33 = vector.shape_cast %32 : vector<128xf32> to vector<128x1xf32>
    %cst_15 = arith.constant 6.400000e+01 : f32
    %34 = vector.broadcast %cst_15 : f32 to vector<128x1xf32>
    %35 = arith.divf %33, %34 : vector<128x1xf32>
    %36 = vector.broadcast %35 : vector<128x1xf32> to vector<128x64xf32>
    %37 = arith.subf %31, %36 : vector<128x64xf32>
    %38 = arith.mulf %37, %37 : vector<128x64xf32>
    %cst_16 = arith.constant dense<0.000000e+00> : vector<128xf32>
    %39 = vector.multi_reduction <add>, %38, %cst_16 [1] : vector<128x64xf32> to vector<128xf32>
    %40 = vector.shape_cast %39 : vector<128xf32> to vector<128x1xf32>
    %cst_17 = arith.constant 6.400000e+01 : f32
    %41 = vector.broadcast %cst_17 : f32 to vector<128x1xf32>
    %42 = arith.divf %40, %41 : vector<128x1xf32>
    %cst_18 = arith.constant 9.99999974E-6 : f32
    %43 = vector.broadcast %cst_18 : f32 to vector<128x1xf32>
    %44 = arith.addf %42, %43 : vector<128x1xf32>
    %45 = math.rsqrt %44 : vector<128x1xf32>
    %46 = vector.broadcast %45 : vector<128x1xf32> to vector<128x64xf32>
    %47 = arith.mulf %37, %46 : vector<128x64xf32>
    %c0_19 = arith.constant 0 : index
    %c0_20 = arith.constant 0 : index
    %48 = vector.load %arg8[%c0_19, %c0_20] : memref<1x64xf32, #tpu.memory_space<vmem>>, vector<1x64xf32>
    %49 = vector.broadcast %48 : vector<1x64xf32> to vector<128x64xf32>
    %50 = arith.mulf %47, %49 : vector<128x64xf32>
    %c0_21 = arith.constant 0 : index
    %c0_22 = arith.constant 0 : index
    %51 = vector.load %arg9[%c0_21, %c0_22] : memref<1x64xf32, #tpu.memory_space<vmem>>, vector<1x64xf32>
    %52 = vector.broadcast %51 : vector<1x64xf32> to vector<128x64xf32>
    %53 = arith.addf %50, %52 : vector<128x64xf32>
    %54 = arith.truncf %53 : vector<128x64xf32> to vector<128x64xbf16>
    %c0_23 = arith.constant 0 : index
    %c0_24 = arith.constant 0 : index
    %c0_25 = arith.constant 0 : index
    %55 = vector.load %arg2[%c0_23, %c0_24, %c0_25] : memref<1x64x64xbf16, #tpu.memory_space<vmem>>, vector<1x64x64xbf16>
    %56 = vector.shape_cast %55 : vector<1x64x64xbf16> to vector<64x64xbf16>
    %cst_26 = arith.constant dense<0.000000e+00> : vector<64x128xf32>
    %57 = tpu.matmul %56, %28, %cst_26 {dimension_numbers = #tpu.dot_dimension_numbers<[1], [1], [0], [0], [0, 0, 1, 0], [], []>} : vector<64x64xbf16>, vector<128x64xbf16>, vector<64x128xf32> -> vector<64x128xf32>
    %c0_27 = arith.constant 0 : index
    %c0_28 = arith.constant 0 : index
    %c0_29 = arith.constant 0 : index
    %58 = vector.load %arg5[%c0_27, %c0_28, %c0_29] : memref<1x16x128xbf16, #tpu.memory_space<vmem>>, vector<1x16x128xbf16>
    %59 = vector.shape_cast %58 : vector<1x16x128xbf16> to vector<16x128xbf16>
    %60 = arith.extf %59 : vector<16x128xbf16> to vector<16x128xf32>
    %61 = tpu.concatenate %60, %60, %60, %60 in 0 : vector<16x128xf32>, vector<16x128xf32>, vector<16x128xf32>, vector<16x128xf32> -> vector<64x128xf32>
    %62 = arith.addf %57, %61 : vector<64x128xf32>
    %c0_30 = arith.constant 0 : index
    %c0_31 = arith.constant 0 : index
    %63 = vector.load %arg11[%c0_30, %c0_31] : memref<64x1xf32, #tpu.memory_space<vmem>>, vector<64x1xf32>
    %cst_32 = arith.constant dense<0xFF800000> : vector<64xf32>
    %64 = vector.multi_reduction <maximumf>, %62, %cst_32 [1] : vector<64x128xf32> to vector<64xf32>
    %65 = vector.shape_cast %64 : vector<64xf32> to vector<64x1xf32>
    %66 = arith.maximumf %63, %65 : vector<64x1xf32>
    %67 = arith.subf %63, %66 : vector<64x1xf32>
    %68 = math.exp %67 : vector<64x1xf32>
    %69 = vector.broadcast %66 : vector<64x1xf32> to vector<64x128xf32>
    %70 = arith.subf %62, %69 : vector<64x128xf32>
    %71 = math.exp %70 : vector<64x128xf32>
    %c0_33 = arith.constant 0 : index
    %c0_34 = arith.constant 0 : index
    %72 = vector.load %arg12[%c0_33, %c0_34] : memref<64x1xf32, #tpu.memory_space<vmem>>, vector<64x1xf32>
    %73 = arith.mulf %68, %72 : vector<64x1xf32>
    %cst_35 = arith.constant dense<0.000000e+00> : vector<64xf32>
    %74 = vector.multi_reduction <add>, %71, %cst_35 [1] : vector<64x128xf32> to vector<64xf32>
    %75 = vector.shape_cast %74 : vector<64xf32> to vector<64x1xf32>
    %76 = arith.addf %73, %75 : vector<64x1xf32>
    %c0_36 = arith.constant 0 : index
    %c0_37 = arith.constant 0 : index
    %77 = vector.load %arg12[%c0_36, %c0_37] : memref<64x1xf32, #tpu.memory_space<vmem>>, vector<64x1xf32>
    tpu.vector_store %arg12[%c0_36, %c0_37], %76 {strides = array<i32>} : memref<64x1xf32, #tpu.memory_space<vmem>>, vector<64x1xf32>,
    %c0_38 = arith.constant 0 : index
    %c0_39 = arith.constant 0 : index
    %78 = vector.load %arg11[%c0_38, %c0_39] : memref<64x1xf32, #tpu.memory_space<vmem>>, vector<64x1xf32>
    tpu.vector_store %arg11[%c0_38, %c0_39], %66 {strides = array<i32>} : memref<64x1xf32, #tpu.memory_space<vmem>>, vector<64x1xf32>,
    %c0_40 = arith.constant 0 : index
    %c0_41 = arith.constant 0 : index
    %79 = vector.load %arg13[%c0_40, %c0_41] : memref<64x16xf32, #tpu.memory_space<vmem>>, vector<64x16xf32>
    %80 = vector.broadcast %68 : vector<64x1xf32> to vector<64x16xf32>
    %81 = arith.mulf %80, %79 : vector<64x16xf32>
    %c0_42 = arith.constant 0 : index
    %c0_43 = arith.constant 0 : index
    %82 = vector.load %arg13[%c0_42, %c0_43] : memref<64x16xf32, #tpu.memory_space<vmem>>, vector<64x16xf32>
    tpu.vector_store %arg13[%c0_42, %c0_43], %81 {strides = array<i32>} : memref<64x16xf32, #tpu.memory_space<vmem>>, vector<64x16xf32>,
    %83 = arith.truncf %71 : vector<64x128xf32> to vector<64x128xbf16>
    %c0_44 = arith.constant 0 : index
    %c0_45 = arith.constant 0 : index
    %84 = vector.load %arg13[%c0_44, %c0_45] : memref<64x16xf32, #tpu.memory_space<vmem>>, vector<16x16xf32>
    %85 = vector.extract_strided_slice %83 {offsets = [0, 0], sizes = [16, 128], strides = [1, 1]} : vector<64x128xbf16> to vector<16x128xbf16>
    %86 = vector.extract_strided_slice %54 {offsets = [0, 0], sizes = [128, 16], strides = [1, 1]} : vector<128x64xbf16> to vector<128x16xbf16>
    %cst_46 = arith.constant dense<0.000000e+00> : vector<16x16xf32>
    %87 = tpu.matmul %85, %86, %cst_46 {dimension_numbers = #tpu.dot_dimension_numbers<[1], [0], [0], [1], [0, 0, 1, 1], [], []>} : vector<16x128xbf16>, vector<128x16xbf16>, vector<16x16xf32> -> vector<16x16xf32>
    %88 = arith.addf %84, %87 : vector<16x16xf32>
    %c0_47 = arith.constant 0 : index
    %c0_48 = arith.constant 0 : index
    %89 = vector.load %arg13[%c0_47, %c0_48] : memref<64x16xf32, #tpu.memory_space<vmem>>, vector<16x16xf32>
    tpu.vector_store %arg13[%c0_47, %c0_48], %88 {strides = array<i32>} : memref<64x16xf32, #tpu.memory_space<vmem>>, vector<16x16xf32>,
    %c16 = arith.constant 16 : index
    %c0_49 = arith.constant 0 : index
    %90 = vector.load %arg13[%c16, %c0_49] : memref<64x16xf32, #tpu.memory_space<vmem>>, vector<16x16xf32>
    %91 = vector.extract_strided_slice %83 {offsets = [16, 0], sizes = [16, 128], strides = [1, 1]} : vector<64x128xbf16> to vector<16x128xbf16>
    %92 = vector.extract_strided_slice %54 {offsets = [0, 16], sizes = [128, 16], strides = [1, 1]} : vector<128x64xbf16> to vector<128x16xbf16>
    %cst_50 = arith.constant dense<0.000000e+00> : vector<16x16xf32>
    %93 = tpu.matmul %91, %92, %cst_50 {dimension_numbers = #tpu.dot_dimension_numbers<[1], [0], [0], [1], [0, 0, 1, 1], [], []>} : vector<16x128xbf16>, vector<128x16xbf16>, vector<16x16xf32> -> vector<16x16xf32>
    %94 = arith.addf %90, %93 : vector<16x16xf32>
    %c16_51 = arith.constant 16 : index
    %c0_52 = arith.constant 0 : index
    %95 = vector.load %arg13[%c16_51, %c0_52] : memref<64x16xf32, #tpu.memory_space<vmem>>, vector<16x16xf32>
    tpu.vector_store %arg13[%c16_51, %c0_52], %94 {strides = array<i32>} : memref<64x16xf32, #tpu.memory_space<vmem>>, vector<16x16xf32>,
    %c32 = arith.constant 32 : index
    %c0_53 = arith.constant 0 : index
    %96 = vector.load %arg13[%c32, %c0_53] : memref<64x16xf32, #tpu.memory_space<vmem>>, vector<16x16xf32>
    %97 = vector.extract_strided_slice %83 {offsets = [32, 0], sizes = [16, 128], strides = [1, 1]} : vector<64x128xbf16> to vector<16x128xbf16>
    %98 = vector.extract_strided_slice %54 {offsets = [0, 32], sizes = [128, 16], strides = [1, 1]} : vector<128x64xbf16> to vector<128x16xbf16>
    %cst_54 = arith.constant dense<0.000000e+00> : vector<16x16xf32>
    %99 = tpu.matmul %97, %98, %cst_54 {dimension_numbers = #tpu.dot_dimension_numbers<[1], [0], [0], [1], [0, 0, 1, 1], [], []>} : vector<16x128xbf16>, vector<128x16xbf16>, vector<16x16xf32> -> vector<16x16xf32>
    %100 = arith.addf %96, %99 : vector<16x16xf32>
    %c32_55 = arith.constant 32 : index
    %c0_56 = arith.constant 0 : index
    %101 = vector.load %arg13[%c32_55, %c0_56] : memref<64x16xf32, #tpu.memory_space<vmem>>, vector<16x16xf32>
    tpu.vector_store %arg13[%c32_55, %c0_56], %100 {strides = array<i32>} : memref<64x16xf32, #tpu.memory_space<vmem>>, vector<16x16xf32>,
    %c48 = arith.constant 48 : index
    %c0_57 = arith.constant 0 : index
    %102 = vector.load %arg13[%c48, %c0_57] : memref<64x16xf32, #tpu.memory_space<vmem>>, vector<16x16xf32>
    %103 = vector.extract_strided_slice %83 {offsets = [48, 0], sizes = [16, 128], strides = [1, 1]} : vector<64x128xbf16> to vector<16x128xbf16>
    %104 = vector.extract_strided_slice %54 {offsets = [0, 48], sizes = [128, 16], strides = [1, 1]} : vector<128x64xbf16> to vector<128x16xbf16>
    %cst_58 = arith.constant dense<0.000000e+00> : vector<16x16xf32>
    %105 = tpu.matmul %103, %104, %cst_58 {dimension_numbers = #tpu.dot_dimension_numbers<[1], [0], [0], [1], [0, 0, 1, 1], [], []>} : vector<16x128xbf16>, vector<128x16xbf16>, vector<16x16xf32> -> vector<16x16xf32>
    %106 = arith.addf %102, %105 : vector<16x16xf32>
    %c48_59 = arith.constant 48 : index
    %c0_60 = arith.constant 0 : index
    %107 = vector.load %arg13[%c48_59, %c0_60] : memref<64x16xf32, #tpu.memory_space<vmem>>, vector<16x16xf32>
    tpu.vector_store %arg13[%c48_59, %c0_60], %106 {strides = array<i32>} : memref<64x16xf32, #tpu.memory_space<vmem>>, vector<16x16xf32>,
    %c1_i32 = arith.constant 1 : i32
    %108 = arith.cmpi eq, %arg1, %c1_i32 : i32
    %109 = arith.extui %108 : i1 to i32
    %c0_i32_61 = arith.constant 0 : i32
    %110 = arith.cmpi ne, %109, %c0_i32_61 : i32
    scf.if %110 {
      %c0_62 = arith.constant 0 : index
      %c0_63 = arith.constant 0 : index
      %111 = vector.load %arg12[%c0_62, %c0_63] : memref<64x1xf32, #tpu.memory_space<vmem>>, vector<64x1xf32>
      %112 = tpu.reciprocal %111 : vector<64x1xf32> -> vector<64x1xf32>
      %c0_64 = arith.constant 0 : index
      %c0_65 = arith.constant 0 : index
      %113 = vector.load %arg13[%c0_64, %c0_65] : memref<64x16xf32, #tpu.memory_space<vmem>>, vector<64x16xf32>
      %114 = vector.broadcast %112 : vector<64x1xf32> to vector<64x16xf32>
      %115 = arith.mulf %113, %114 : vector<64x16xf32>
      %c0_66 = arith.constant 0 : index
      %c0_67 = arith.constant 0 : index
      %c0_68 = arith.constant 0 : index
      %116 = vector.load %arg10[%c0_66, %c0_67, %c0_68] : memref<1x64x16xf32, #tpu.memory_space<vmem>>, vector<1x64x16xf32>
      %117 = vector.shape_cast %116 : vector<1x64x16xf32> to vector<64x16xf32>
      %118 = vector.shape_cast %115 : vector<64x16xf32> to vector<1x64x16xf32>
      tpu.vector_store %arg10[%c0_66, %c0_67, %c0_68], %118 {strides = array<i32>} : memref<1x64x16xf32, #tpu.memory_space<vmem>>, vector<1x64x16xf32>,
    } else {
    }
    return
  }
  func.func @transform_0(%arg0: i32, %arg1: i32) -> (i32, i32, i32) {
    %c0_i32 = arith.constant 0 : i32
    %c0_i32_0 = arith.constant 0 : i32
    %c0_i32_1 = arith.constant 0 : i32
    return %arg0, %c0_i32, %c0_i32_0 : i32, i32, i32
  }
  func.func @transform_1(%arg0: i32, %arg1: i32) -> (i32, i32, i32) {
    %c0_i32 = arith.constant 0 : i32
    %c0_i32_0 = arith.constant 0 : i32
    return %arg0, %arg1, %c0_i32 : i32, i32, i32
  }
  func.func @transform_2(%arg0: i32, %arg1: i32) -> (i32, i32, i32) {
    %c0_i32 = arith.constant 0 : i32
    %c0_i32_0 = arith.constant 0 : i32
    return %arg0, %arg1, %c0_i32 : i32, i32, i32
  }
  func.func @transform_3(%arg0: i32, %arg1: i32) -> (i32, i32, i32) {
    %c0_i32 = arith.constant 0 : i32
    %c0_i32_0 = arith.constant 0 : i32
    return %arg0, %c0_i32, %arg1 : i32, i32, i32
  }
  func.func @transform_4(%arg0: i32, %arg1: i32) -> (i32, i32) {
    %c0_i32 = arith.constant 0 : i32
    %c0_i32_0 = arith.constant 0 : i32
    %c0_i32_1 = arith.constant 0 : i32
    return %c0_i32, %c0_i32_0 : i32, i32
  }
  func.func @transform_5(%arg0: i32, %arg1: i32) -> (i32, i32) {
    %c0_i32 = arith.constant 0 : i32
    %c0_i32_0 = arith.constant 0 : i32
    %c0_i32_1 = arith.constant 0 : i32
    return %c0_i32, %c0_i32_0 : i32, i32
  }
  func.func @transform_6(%arg0: i32, %arg1: i32) -> (i32, i32) {
    %c0_i32 = arith.constant 0 : i32
    %c0_i32_0 = arith.constant 0 : i32
    %c0_i32_1 = arith.constant 0 : i32
    return %c0_i32, %c0_i32_0 : i32, i32
  }
  func.func @transform_7(%arg0: i32, %arg1: i32) -> (i32, i32) {
    %c0_i32 = arith.constant 0 : i32
    %c0_i32_0 = arith.constant 0 : i32
    %c0_i32_1 = arith.constant 0 : i32
    return %c0_i32, %c0_i32_0 : i32, i32
  }
  func.func @transform_8(%arg0: i32, %arg1: i32) -> (i32, i32, i32) {
    %c0_i32 = arith.constant 0 : i32
    %c0_i32_0 = arith.constant 0 : i32
    %c0_i32_1 = arith.constant 0 : i32
    return %arg0, %c0_i32, %c0_i32_0 : i32, i32, i32
  }
}

</mosaic_0001>

<llo_original>
// kernel: tpu_custom_call.1
$region0: #{tpu_custom_call.1}
  #allocation0 [shape = 'u32[]', space=smem, size = 0x4, offset = 0x4, fixed_abs, tag = 'smem constant byte address 0x4 - core index']
  #allocation1 [shape = 'u32[144,128]{1,0:T(1,128)}', space=vmem, size = 0x12000, scoped, tag = 'internal scratch']
  #allocation2 [shape = 'f32[64,1]{1,0:T(8,128)}', space=vmem, size = 0x8000, scoped, tag = 'scratch operand']
  #allocation3 [shape = 'f32[64,1]{1,0:T(8,128)}', space=vmem, size = 0x8000, scoped, tag = 'scratch operand']
  #allocation4 [shape = 'f32[64,16]{1,0:T(8,128)}', space=vmem, size = 0x8000, scoped, tag = 'scratch operand']
  %s0 = inlined_call_operand.vmem [shape: bf16[2,64,64], index: 0, kind: input, shape index: {}]
  %s1 = inlined_call_operand.vmem [shape: bf16[2,256,64], index: 1, kind: input, shape index: {}]
  %s2 = inlined_call_operand.vmem [shape: bf16[2,256,64], index: 2, kind: input, shape index: {}]
  %s3 = inlined_call_operand.vmem [shape: bf16[2,16,256], index: 3, kind: input, shape index: {}]
  %s4 = inlined_call_operand.vmem [shape: f32[1,64], index: 4, kind: input, shape index: {}]
  %s5 = inlined_call_operand.vmem [shape: f32[1,64], index: 5, kind: input, shape index: {}]
  %s6 = inlined_call_operand.vmem [shape: f32[1,64], index: 6, kind: input, shape index: {}]
  %s7 = inlined_call_operand.vmem [shape: f32[1,64], index: 7, kind: input, shape index: {}]
  %s8 = inlined_call_operand.vmem [shape: f32[2,64,16], index: 8, kind: output, shape index: {}]
  %s9 = sld [smem:[#allocation0]]
  $region114: #{tpu_custom_call.1} parent=0
    _
  %s11 = ssub.s32 1, %s9
  %s12 = scalar_select 0, %s11, %s9
  $region1: #{tpu_custom_call.1} parent=0
    #allocation5 [shape = 'u8[8192]{0}', space=vmem, size = 0x2000, scoped, tag = 'input window, operand 3']
    loop: start=0, step=1, limit=6
    $region2: #{tpu_custom_call.1} parent=1 // loop_pre_header
      _
    $region3: #{tpu_custom_call.1} parent=1 // loop_header
      %s14 = sphi 0, %s18
      %p15 = scmp.ge.s32.totalorder %s14, 6
      %s21 = sphi 0, %s33
      %s22 = sphi 0, %s29
      %s23 = sphi 0, %s21
      %s24 = sphi 0, %s22
      %s25 = sphi 0, %s23
      %s26 = sphi 0, %s24
      %s36 = sphi 0, %s38
      %s39 = sphi 0, %s36
      %s40 = sphi 0, %s39
      %s56 = sphi 0, %s40
      %s64 = sphi 0, %s66
      %s67 = sphi 0, %s64
      %s68 = sphi 0, %s67
      %s84 = sphi 0, %s68
      %s92 = sphi 0, %s94
      %s95 = sphi 0, %s92
      %s96 = sphi 0, %s95
      %s112 = sphi 0, %s96
      %s120 = sphi 0, %s122
      %s123 = sphi 0, %s120
      %s124 = sphi 0, %s123
      %s140 = sphi 0, %s124
      %s144 = sphi 0, %s144
      %s146 = sphi 0, %s144
      %s147 = sphi 0, %s146
      %s161 = sphi 0, %s147
      %s165 = sphi 0, %s165
      %s167 = sphi 0, %s165
      %s168 = sphi 0, %s167
      %s182 = sphi 0, %s168
      %s186 = sphi 0, %s186
      %s188 = sphi 0, %s186
      %s189 = sphi 0, %s188
      %s203 = sphi 0, %s189
      %s207 = sphi 0, %s207
      %s209 = sphi 0, %s207
      %s210 = sphi 0, %s209
      %s224 = sphi 0, %s210
      %s230 = sphi 0, %s232
      %s233 = sphi 0, %s230
      %s234 = sphi 0, %s233
      %s250 = sphi 0, %s234
    $region4: #{tpu_custom_call.1} parent=1 // loop_header_branch
      %17 = sbr.rel (%p15) target = $region8
    $region5: #{tpu_custom_call.1} parent=1 // loop_body
      %s19 = ssub.s32 %s14, 1
      %s20 = ssub.s32 %s14, 2
      %s27 = sadd.s32 1, %s22
      %p28 = scmp.ge.s32.totalorder %s27, 2
      %s29 = scalar_select %p28, 0, %s27
      %s30 = sadd.s32 1, %s21
      %s31 = scalar_select %p28, %s30, %s21
      %p32 = scmp.ge.s32.totalorder %s31, 2
      %s33 = scalar_select %p32, 0, %s31
      %s34 = ssub.s32 %s21, %s33
      %p35 = scmp.eq.s32.totalorder %s34, 0
      %s37 = sadd.s32 %s36, 1
      %s38 = scalar_select %p35, %s36, %s37
      %p41 = pneg %p35
      %p42 = scmp.eq.s32.totalorder %s14, 3
      %p43 = por %p41, %p42
      %p44 = scmp.ne.s32.totalorder %s36, %s39
      %p45 = scmp.eq.s32.totalorder %s14, 0
      %p46 = por %p44, %p45
      %p47 = scmp.ne.s32.totalorder %s36, %s39
      %p48 = scmp.eq.s32.totalorder %s19, 3
      %p49 = por %p47, %p48
      %p50 = scmp.ne.s32.totalorder %s39, %s40
      %p51 = scmp.eq.s32.totalorder %s19, 0
      %p52 = por %p50, %p51
      %p53 = scmp.ne.s32.totalorder %s39, %s40
      %p54 = scmp.eq.s32.totalorder %s20, 3
      %p55 = por %p53, %p54
      %p57 = scmp.ne.s32.totalorder %s40, %s56
      %p58 = scmp.eq.s32.totalorder %s20, 0
      %p59 = por %p57, %p58
      %s60 = ssub.s32 %s21, %s33
      %s61 = ssub.s32 %s22, %s29
      %s62 = sor.u32 %s60, %s61
      %p63 = scmp.eq.s32.totalorder %s62, 0
      %s65 = sadd.s32 %s64, 1
      %s66 = scalar_select %p63, %s64, %s65
      %p69 = pneg %p63
      %p70 = scmp.eq.s32.totalorder %s14, 3
      %p71 = por %p69, %p70
      %p72 = scmp.ne.s32.totalorder %s64, %s67
      %p73 = scmp.eq.s32.totalorder %s14, 0
      %p74 = por %p72, %p73
      %p75 = scmp.ne.s32.totalorder %s64, %s67
      %p76 = scmp.eq.s32.totalorder %s19, 3
      %p77 = por %p75, %p76
      %p78 = scmp.ne.s32.totalorder %s67, %s68
      %p79 = scmp.eq.s32.totalorder %s19, 0
      %p80 = por %p78, %p79
      %p81 = scmp.ne.s32.totalorder %s67, %s68
      %p82 = scmp.eq.s32.totalorder %s20, 3
      %p83 = por %p81, %p82
      %p85 = scmp.ne.s32.totalorder %s68, %s84
      %p86 = scmp.eq.s32.totalorder %s20, 0
      %p87 = por %p85, %p86
      %s88 = ssub.s32 %s21, %s33
      %s89 = ssub.s32 %s22, %s29
      %s90 = sor.u32 %s88, %s89
      %p91 = scmp.eq.s32.totalorder %s90, 0
      %s93 = sadd.s32 %s92, 1
      %s94 = scalar_select %p91, %s92, %s93
      %p97 = pneg %p91
      %p98 = scmp.eq.s32.totalorder %s14, 3
      %p99 = por %p97, %p98
      %p100 = scmp.ne.s32.totalorder %s92, %s95
      %p101 = scmp.eq.s32.totalorder %s14, 0
      %p102 = por %p100, %p101
      %p103 = scmp.ne.s32.totalorder %s92, %s95
      %p104 = scmp.eq.s32.totalorder %s19, 3
      %p105 = por %p103, %p104
      %p106 = scmp.ne.s32.totalorder %s95, %s96
      %p107 = scmp.eq.s32.totalorder %s19, 0
      %p108 = por %p106, %p107
      %p109 = scmp.ne.s32.totalorder %s95, %s96
      %p110 = scmp.eq.s32.totalorder %s20, 3
      %p111 = por %p109, %p110
      %p113 = scmp.ne.s32.totalorder %s96, %s112
      %p114 = scmp.eq.s32.totalorder %s20, 0
      %p115 = por %p113, %p114
      %s116 = ssub.s32 %s21, %s33
      %s117 = ssub.s32 %s22, %s29
      %s118 = sor.u32 %s116, %s117
      %p119 = scmp.eq.s32.totalorder %s118, 0
      %s121 = sadd.s32 %s120, 1
      %s122 = scalar_select %p119, %s120, %s121
      %p125 = pneg %p119
      %p126 = scmp.eq.s32.totalorder %s14, 3
      %p127 = por %p125, %p126
      %p128 = scmp.ne.s32.totalorder %s120, %s123
      %p129 = scmp.eq.s32.totalorder %s14, 0
      %p130 = por %p128, %p129
      %p131 = scmp.ne.s32.totalorder %s120, %s123
      %p132 = scmp.eq.s32.totalorder %s19, 3
      %p133 = por %p131, %p132
      %p134 = scmp.ne.s32.totalorder %s123, %s124
      %p135 = scmp.eq.s32.totalorder %s19, 0
      %p136 = por %p134, %p135
      %p137 = scmp.ne.s32.totalorder %s123, %s124
      %p138 = scmp.eq.s32.totalorder %s20, 3
      %p139 = por %p137, %p138
      %p141 = scmp.ne.s32.totalorder %s124, %s140
      %p142 = scmp.eq.s32.totalorder %s20, 0
      %p143 = por %p141, %p142
      %s145 = sadd.s32 %s144, 1
      %p148 = scmp.eq.s32.totalorder %s14, 3
      %p149 = scmp.ne.s32.totalorder %s144, %s146
      %p150 = scmp.eq.s32.totalorder %s14, 0
      %p151 = por %p149, %p150
      %p152 = scmp.ne.s32.totalorder %s144, %s146
      %p153 = scmp.eq.s32.totalorder %s19, 3
      %p154 = por %p152, %p153
      %p155 = scmp.ne.s32.totalorder %s146, %s147
      %p156 = scmp.eq.s32.totalorder %s19, 0
      %p157 = por %p155, %p156
      %p158 = scmp.ne.s32.totalorder %s146, %s147
      %p159 = scmp.eq.s32.totalorder %s20, 3
      %p160 = por %p158, %p159
      %p162 = scmp.ne.s32.totalorder %s147, %s161
      %p163 = scmp.eq.s32.totalorder %s20, 0
      %p164 = por %p162, %p163
      %s166 = sadd.s32 %s165, 1
      %p169 = scmp.eq.s32.totalorder %s14, 3
      %p170 = scmp.ne.s32.totalorder %s165, %s167
      %p171 = scmp.eq.s32.totalorder %s14, 0
      %p172 = por %p170, %p171
      %p173 = scmp.ne.s32.totalorder %s165, %s167
      %p174 = scmp.eq.s32.totalorder %s19, 3
      %p175 = por %p173, %p174
      %p176 = scmp.ne.s32.totalorder %s167, %s168
      %p177 = scmp.eq.s32.totalorder %s19, 0
      %p178 = por %p176, %p177
      %p179 = scmp.ne.s32.totalorder %s167, %s168
      %p180 = scmp.eq.s32.totalorder %s20, 3
      %p181 = por %p179, %p180
      %p183 = scmp.ne.s32.totalorder %s168, %s182
      %p184 = scmp.eq.s32.totalorder %s20, 0
      %p185 = por %p183, %p184
      %s187 = sadd.s32 %s186, 1
      %p190 = scmp.eq.s32.totalorder %s14, 3
      %p191 = scmp.ne.s32.totalorder %s186, %s188
      %p192 = scmp.eq.s32.totalorder %s14, 0
      %p193 = por %p191, %p192
      %p194 = scmp.ne.s32.totalorder %s186, %s188
      %p195 = scmp.eq.s32.totalorder %s19, 3
      %p196 = por %p194, %p195
      %p197 = scmp.ne.s32.totalorder %s188, %s189
      %p198 = scmp.eq.s32.totalorder %s19, 0
      %p199 = por %p197, %p198
      %p200 = scmp.ne.s32.totalorder %s188, %s189
      %p201 = scmp.eq.s32.totalorder %s20, 3
      %p202 = por %p200, %p201
      %p204 = scmp.ne.s32.totalorder %s189, %s203
      %p205 = scmp.eq.s32.totalorder %s20, 0
      %p206 = por %p204, %p205
      %s208 = sadd.s32 %s207, 1
      %p211 = scmp.eq.s32.totalorder %s14, 3
      %p212 = scmp.ne.s32.totalorder %s207, %s209
      %p213 = scmp.eq.s32.totalorder %s14, 0
      %p214 = por %p212, %p213
      %p215 = scmp.ne.s32.totalorder %s207, %s209
      %p216 = scmp.eq.s32.totalorder %s19, 3
      %p217 = por %p215, %p216
      %p218 = scmp.ne.s32.totalorder %s209, %s210
      %p219 = scmp.eq.s32.totalorder %s19, 0
      %p220 = por %p218, %p219
      %p221 = scmp.ne.s32.totalorder %s209, %s210
      %p222 = scmp.eq.s32.totalorder %s20, 3
      %p223 = por %p221, %p222
      %p225 = scmp.ne.s32.totalorder %s210, %s224
      %p226 = scmp.eq.s32.totalorder %s20, 0
      %p227 = por %p225, %p226
      %s228 = ssub.s32 %s21, %s33
      %p229 = scmp.eq.s32.totalorder %s228, 0
      %s231 = sadd.s32 %s230, 1
      %s232 = scalar_select %p229, %s230, %s231
      %p235 = pneg %p229
      %p236 = scmp.eq.s32.totalorder %s14, 3
      %p237 = por %p235, %p236
      %p238 = scmp.ne.s32.totalorder %s230, %s233
      %p239 = scmp.eq.s32.totalorder %s14, 0
      %p240 = por %p238, %p239
      %p241 = scmp.ne.s32.totalorder %s230, %s233
      %p242 = scmp.eq.s32.totalorder %s19, 3
      %p243 = por %p241, %p242
      %p244 = scmp.ne.s32.totalorder %s233, %s234
      %p245 = scmp.eq.s32.totalorder %s19, 0
      %p246 = por %p244, %p245
      %p247 = scmp.ne.s32.totalorder %s233, %s234
      %p248 = scmp.eq.s32.totalorder %s20, 3
      %p249 = por %p247, %p248
      %p251 = scmp.ne.s32.totalorder %s234, %s250
      %p252 = scmp.eq.s32.totalorder %s20, 0
      %p253 = por %p251, %p252
      %p254 = scmp.le.s32.totalorder 1, %s14
      %p255 = scmp.lt.s32.totalorder %s14, 5
      %p256 = pnand %p254, %p255
      %p257 = pneg %p256
      // Predicated region
      $region9: #{tpu_custom_call.1} parent=5 // pred_check
        _
      $region10: #{tpu_custom_call.1} parent=5 // pred_check_branch
        %259 = sbr.rel (%p256) target = $region12
      $region11: #{tpu_custom_call.1} parent=5 // pred_region
        %s260 = ssub.s32 %s14, 1
        // Predicated region
        $region13: #{tpu_custom_call.1} parent=11 // pred_check
          %p261 = pneg %p157
        $region14: #{tpu_custom_call.1} parent=11 // pred_check_branch
          %263 = sbr.rel (%p261) target = $region16
        $region15: #{tpu_custom_call.1} parent=11 // pred_region
          _
        $region16: #{tpu_custom_call.1} parent=11 // pred_fallthru
          _
        // Predicated region
        $region17: #{tpu_custom_call.1} parent=11 // pred_check
          %p264 = pneg %p178
        $region18: #{tpu_custom_call.1} parent=11 // pred_check_branch
          %266 = sbr.rel (%p264) target = $region20
        $region19: #{tpu_custom_call.1} parent=11 // pred_region
          _
        $region20: #{tpu_custom_call.1} parent=11 // pred_fallthru
          _
        // Predicated region
        $region21: #{tpu_custom_call.1} parent=11 // pred_check
          %p267 = pneg %p199
        $region22: #{tpu_custom_call.1} parent=11 // pred_check_branch
          %269 = sbr.rel (%p267) target = $region24
        $region23: #{tpu_custom_call.1} parent=11 // pred_region
          _
        $region24: #{tpu_custom_call.1} parent=11 // pred_fallthru
          _
        // Predicated region
        $region25: #{tpu_custom_call.1} parent=11 // pred_check
          %p270 = pneg %p220
        $region26: #{tpu_custom_call.1} parent=11 // pred_check_branch
          %272 = sbr.rel (%p270) target = $region28
        $region27: #{tpu_custom_call.1} parent=11 // pred_region
          _
        $region28: #{tpu_custom_call.1} parent=11 // pred_fallthru
          _
      $region12: #{tpu_custom_call.1} parent=5 // pred_fallthru
        _
      %p273 = scmp.lt.s32.totalorder %s14, 4
      // Predicated region
      $region29: #{tpu_custom_call.1} parent=5 // pred_check
        %p274 = pneg %p273
      $region30: #{tpu_custom_call.1} parent=5 // pred_check_branch
        %276 = sbr.rel (%p274) target = $region32
      $region31: #{tpu_custom_call.1} parent=5 // pred_region
        // Predicated region
        $region33: #{tpu_custom_call.1} parent=31 // pred_check
          %p277 = pneg %p46
        $region34: #{tpu_custom_call.1} parent=31 // pred_check_branch
          %279 = sbr.rel (%p277) target = $region36
        $region35: #{tpu_custom_call.1} parent=31 // pred_region
          %p280 = scmp.lt.s32.totalorder %s21, 1
          %s281 = scalar_select %p280, %s21, 1
          %s282 = smul.addr %s281, 8
          %s283 = smul.addr %s282, 4
          %s284 = scalar_lea.vmem %s0, %s283
        $region36: #{tpu_custom_call.1} parent=31 // pred_fallthru
          _
        // Predicated region
        $region37: #{tpu_custom_call.1} parent=31 // pred_check
          %p285 = pneg %p74
        $region38: #{tpu_custom_call.1} parent=31 // pred_check_branch
          %287 = sbr.rel (%p285) target = $region40
        $region39: #{tpu_custom_call.1} parent=31 // pred_region
          %s288 = smul.u32 16, %s22
          %p289 = scmp.lt.s32.totalorder %s21, 1
          %s290 = scalar_select %p289, %s21, 1
          %p291 = scmp.lt.s32.totalorder %s288, 31
          %s292 = scalar_select %p291, %s288, 31
          %s293 = smul.addr %s290, 32
          %s294 = sadd.s32 %s292, %s293
          %s295 = smul.addr %s294, 4
          %s296 = scalar_lea.vmem %s1, %s295
          %s297 = smul.u32 16, %s22
        $region40: #{tpu_custom_call.1} parent=31 // pred_fallthru
          _
        // Predicated region
        $region41: #{tpu_custom_call.1} parent=31 // pred_check
          %p298 = pneg %p102
        $region42: #{tpu_custom_call.1} parent=31 // pred_check_branch
          %300 = sbr.rel (%p298) target = $region44
        $region43: #{tpu_custom_call.1} parent=31 // pred_region
          %s301 = smul.u32 16, %s22
          %p302 = scmp.lt.s32.totalorder %s21, 1
          %s303 = scalar_select %p302, %s21, 1
          %p304 = scmp.lt.s32.totalorder %s301, 31
          %s305 = scalar_select %p304, %s301, 31
          %s306 = smul.addr %s303, 32
          %s307 = sadd.s32 %s305, %s306
          %s308 = smul.addr %s307, 4
          %s309 = scalar_lea.vmem %s2, %s308
          %s310 = smul.u32 16, %s22
        $region44: #{tpu_custom_call.1} parent=31 // pred_fallthru
          _
        // Predicated region
        $region45: #{tpu_custom_call.1} parent=31 // pred_check
          %p311 = pneg %p130
        $region46: #{tpu_custom_call.1} parent=31 // pred_check_branch
          %313 = sbr.rel (%p311) target = $region48
        $region47: #{tpu_custom_call.1} parent=31 // pred_region
          %s314 = sand.u32 %s120, 1
          %s315 = sand.u32 %s120, 1
          %s316 = smul.addr %s315, 8
          %s317 = scalar_lea.vmem [#allocation5], %s316
          %s318 = smul.addr %s21, 4
          %s319 = sadd.s32 %s22, %s318
          %s320 = smul.addr %s319, 4
          %s321 = scalar_lea.vmem %s3, %s320
          // Predicated region
          $region49: #{tpu_custom_call.1} parent=47 // pred_check
            _
          $region50: #{tpu_custom_call.1} parent=47 // pred_check_branch
            %323 = sbr.rel (0) target = $region52
          $region51: #{tpu_custom_call.1} parent=47 // pred_region
            // Predicated region
            $region53: #{tpu_custom_call.1} parent=51 // pred_check
              _
            $region54: #{tpu_custom_call.1} parent=51 // pred_check_branch
              %325 = sbr.rel target = $region56
            $region55: #{tpu_custom_call.1} parent=51 // pred_region
              // Predicated region
              $region68: #{tpu_custom_call.1} parent=55 // pred_check
                _
              $region69: #{tpu_custom_call.1} parent=55 // pred_check_branch
                %343 = sbr.rel (0) target = $region71
              $region70: #{tpu_custom_call.1} parent=55 // pred_region
                loop: start=0, step=1, limit=1
                $region72: #{tpu_custom_call.1} parent=70 // loop_pre_header
                  _
                $region73: #{tpu_custom_call.1} parent=70 // loop_header
                  %s345 = sphi 0, %s349
                  %p346 = scmp.ge.s32.totalorder %s345, 1
                  %s350 = sphi %s321, %s321
                  %s351 = sphi %s317, %s317
                $region74: #{tpu_custom_call.1} parent=70 // loop_header_branch
                  %348 = sbr.rel (%p346) target = $region78
                $region75: #{tpu_custom_call.1} parent=70 // loop_body
                  _
                $region76: #{tpu_custom_call.1} parent=70 // loop_footer
                  %s349 = sadd.s32 1, %s345
                $region77: #{tpu_custom_call.1} parent=70 // loop_footer_branch
                  %344 = sbr.rel target = $region73
                $region78: #{tpu_custom_call.1} parent=70 // loop_exit
                  _
                %s353 = ssub.s32 16, 1
                loop: start=0, step=1, limit=1
                $region79: #{tpu_custom_call.1} parent=70 // loop_pre_header
                  _
                $region80: #{tpu_custom_call.1} parent=70 // loop_header
                  %s355 = sphi 0, %s359
                  %p356 = scmp.ge.s32.totalorder %s355, 1
                  %s360 = sphi %s321, %s321
                  %s361 = sphi %s317, %s317
                $region81: #{tpu_custom_call.1} parent=70 // loop_header_branch
                  %358 = sbr.rel (%p356) target = $region85
                $region82: #{tpu_custom_call.1} parent=70 // loop_body
                  %v362 = vld [vmem:[%s360] sm:%s353]
                  %363 = vst [vmem:[%s361] sm:%s353] %v362
                  %v364 = vld [vmem:[%s360 + $0x8] sm:%s353]
                  %365 = vst [vmem:[%s361 + $0x4] sm:%s353] %v364
                $region83: #{tpu_custom_call.1} parent=70 // loop_footer
                  %s359 = sadd.s32 1, %s355
                $region84: #{tpu_custom_call.1} parent=70 // loop_footer_branch
                  %354 = sbr.rel target = $region80
                $region85: #{tpu_custom_call.1} parent=70 // loop_exit
                  _
              $region71: #{tpu_custom_call.1} parent=55 // pred_fallthru
                _
            $region56: #{tpu_custom_call.1} parent=51 // pred_fallthru
              _
            // Predicated region
            $region57: #{tpu_custom_call.1} parent=51 // pred_check
              _
            $region58: #{tpu_custom_call.1} parent=51 // pred_check_branch
              %327 = sbr.rel (0) target = $region60
            $region59: #{tpu_custom_call.1} parent=51 // pred_region
              %s329 = ssub.s32 16, 1
              loop: start=0, step=1, limit=1
              $region61: #{tpu_custom_call.1} parent=59 // loop_pre_header
                _
              $region62: #{tpu_custom_call.1} parent=59 // loop_header
                %s331 = sphi 0, %s335
                %p332 = scmp.ge.s32.totalorder %s331, 1
                %s336 = sphi %s321, %s321
                %s337 = sphi %s317, %s317
              $region63: #{tpu_custom_call.1} parent=59 // loop_header_branch
                %334 = sbr.rel (%p332) target = $region67
              $region64: #{tpu_custom_call.1} parent=59 // loop_body
                %v338 = vld [vmem:[%s336] sm:%s329]
                %339 = vst [vmem:[%s337] sm:%s329] %v338
                %v340 = vld [vmem:[%s336 + $0x8] sm:%s329]
                %341 = vst [vmem:[%s337 + $0x4] sm:%s329] %v340
              $region65: #{tpu_custom_call.1} parent=59 // loop_footer
                %s335 = sadd.s32 1, %s331
              $region66: #{tpu_custom_call.1} parent=59 // loop_footer_branch
                %330 = sbr.rel target = $region62
              $region67: #{tpu_custom_call.1} parent=59 // loop_exit
                _
            $region60: #{tpu_custom_call.1} parent=51 // pred_fallthru
              _
          $region52: #{tpu_custom_call.1} parent=47 // pred_fallthru
            _
          %366 = vnop
        $region48: #{tpu_custom_call.1} parent=31 // pred_fallthru
          _
      $region32: #{tpu_custom_call.1} parent=5 // pred_fallthru
        _
      %p367 = scmp.le.s32.totalorder 1, %s14
      %p368 = scmp.lt.s32.totalorder %s14, 5
      %p369 = pnand %p367, %p368
      %p370 = pneg %p369
      // Predicated region
      $region86: #{tpu_custom_call.1} parent=5 // pred_check
        _
      $region87: #{tpu_custom_call.1} parent=5 // pred_check_branch
        %372 = sbr.rel (%p369) target = $region89
      $region88: #{tpu_custom_call.1} parent=5 // pred_region
        %s373 = ssub.s32 %s14, 1
        %s374 = sand.u32 %s123, 1
        %s375 = sand.u32 %s123, 1
        %s376 = smul.addr %s375, 8
        %s377 = scalar_lea.vmem [#allocation5], %s376
        // Predicated region
        $region90: #{tpu_custom_call.1} parent=88 // pred_check
          %p378 = pneg %p136
        $region91: #{tpu_custom_call.1} parent=88 // pred_check_branch
          %380 = sbr.rel (%p378) target = $region93
        $region92: #{tpu_custom_call.1} parent=88 // pred_region
          _
        $region93: #{tpu_custom_call.1} parent=88 // pred_fallthru
          _
        %p381 = scmp.lt.s32.totalorder %s23, 1
        %s382 = scalar_select %p381, %s23, 1
        %s383 = smul.addr %s382, 8
        %s384 = smul.addr %s383, 4
        %s385 = scalar_lea.vmem %s0, %s384
        %p386 = pneg %p52
        %p387 = pneg %p49
        %s388 = smul.u32 16, %s24
        %p389 = scmp.lt.s32.totalorder %s23, 1
        %s390 = scalar_select %p389, %s23, 1
        %p391 = scmp.lt.s32.totalorder %s388, 31
        %s392 = scalar_select %p391, %s388, 31
        %s393 = smul.addr %s390, 32
        %s394 = sadd.s32 %s392, %s393
        %s395 = smul.addr %s394, 4
        %s396 = scalar_lea.vmem %s1, %s395
        %p397 = pneg %p80
        %p398 = pneg %p77
        %s399 = smul.u32 16, %s24
        %p400 = scmp.lt.s32.totalorder %s23, 1
        %s401 = scalar_select %p400, %s23, 1
        %p402 = scmp.lt.s32.totalorder %s399, 31
        %s403 = scalar_select %p402, %s399, 31
        %s404 = smul.addr %s401, 32
        %s405 = sadd.s32 %s403, %s404
        %s406 = smul.addr %s405, 4
        %s407 = scalar_lea.vmem %s2, %s406
        %p408 = pneg %p108
        %p409 = pneg %p105
        %s410 = sand.u32 %s123, 1
        %s411 = sand.u32 %s123, 1
        %s412 = smul.addr %s411, 8
        %s413 = scalar_lea.vmem [#allocation5], %s412
        %p414 = pneg %p136
        %p415 = pneg %p133
        %p416 = pneg %p157
        %p417 = pneg %p154
        %p418 = pneg %p178
        %p419 = pneg %p175
        %p420 = pneg %p199
        %p421 = pneg %p196
        %p422 = pneg %p220
        %p423 = pneg %p217
        %p424 = pneg %p246
        %p425 = pneg %p243
        %p426 = scmp.lt.s32.totalorder %s23, 1
        %s427 = scalar_select %p426, %s23, 1
        %s428 = smul.addr %s427, 8
        %s429 = smul.addr %s428, 8
        %s430 = scalar_lea.vmem %s8, %s429
        %p431 = scmp.lt.s32.totalorder %s23, 1
        %s432 = scalar_select %p431, %s23, 1
        %s433 = smul.addr %s432, 8
        %s434 = smul.addr %s433, 4
        %s435 = scalar_lea.vmem %s0, %s434
        %s436 = smul.u32 16, %s24
        %p437 = scmp.lt.s32.totalorder %s23, 1
        %s438 = scalar_select %p437, %s23, 1
        %p439 = scmp.lt.s32.totalorder %s436, 31
        %s440 = scalar_select %p439, %s436, 31
        %s441 = smul.addr %s438, 32
        %s442 = sadd.s32 %s440, %s441
        %s443 = smul.addr %s442, 4
        %s444 = scalar_lea.vmem %s1, %s443
        %s445 = smul.u32 16, %s24
        %s446 = smul.u32 16, %s24
        %p447 = scmp.lt.s32.totalorder %s23, 1
        %s448 = scalar_select %p447, %s23, 1
        %p449 = scmp.lt.s32.totalorder %s446, 31
        %s450 = scalar_select %p449, %s446, 31
        %s451 = smul.addr %s448, 32
        %s452 = sadd.s32 %s450, %s451
        %s453 = smul.addr %s452, 4
        %s454 = scalar_lea.vmem %s2, %s453
        %s455 = smul.u32 16, %s24
        %p456 = scmp.lt.s32.totalorder %s23, 1
        %s457 = scalar_select %p456, %s23, 1
        %s458 = smul.addr %s457, 8
        %s459 = smul.addr %s458, 8
        %s460 = scalar_lea.vmem %s8, %s459
        %p462 = scmp.eq.s32.totalorder %s24, 0
        // Predicated region
        $region94: #{tpu_custom_call.1} parent=88 // pred_check
          %p463 = pneg %p462
        $region95: #{tpu_custom_call.1} parent=88 // pred_check_branch
          %465 = sbr.rel (%p463) target = $region97
        $region96: #{tpu_custom_call.1} parent=88 // pred_region
          %vm466 = vcmask 7168
          %467 = vst.msk [vmem:[#allocation2] sm:$0xff] %vm466, -1e+30
          %468 = vst.msk [vmem:[#allocation2 + $0x8] sm:$0xff] %vm466, -1e+30
          %469 = vst.msk [vmem:[#allocation2 + $0x10] sm:$0xff] %vm466, -1e+30
          %470 = vst.msk [vmem:[#allocation2 + $0x18] sm:$0xff] %vm466, -1e+30
          %471 = vst.msk [vmem:[#allocation2 + $0x20] sm:$0xff] %vm466, -1e+30
          %472 = vst.msk [vmem:[#allocation2 + $0x28] sm:$0xff] %vm466, -1e+30
          %473 = vst.msk [vmem:[#allocation2 + $0x30] sm:$0xff] %vm466, -1e+30
          %474 = vst.msk [vmem:[#allocation2 + $0x38] sm:$0xff] %vm466, -1e+30
          %475 = vst.msk [vmem:[#allocation3] sm:$0xff] %vm466, 0.0
          %476 = vst.msk [vmem:[#allocation3 + $0x8] sm:$0xff] %vm466, 0.0
          %477 = vst.msk [vmem:[#allocation3 + $0x10] sm:$0xff] %vm466, 0.0
          %478 = vst.msk [vmem:[#allocation3 + $0x18] sm:$0xff] %vm466, 0.0
          %479 = vst.msk [vmem:[#allocation3 + $0x20] sm:$0xff] %vm466, 0.0
          %480 = vst.msk [vmem:[#allocation3 + $0x28] sm:$0xff] %vm466, 0.0
          %481 = vst.msk [vmem:[#allocation3 + $0x30] sm:$0xff] %vm466, 0.0
          %482 = vst.msk [vmem:[#allocation3 + $0x38] sm:$0xff] %vm466, 0.0
          %vm483 = vcmask 130048
          %484 = vst.msk [vmem:[#allocation4] sm:$0xff] %vm483, 0.0
          %485 = vst.msk [vmem:[#allocation4 + $0x8] sm:$0xff] %vm483, 0.0
          %486 = vst.msk [vmem:[#allocation4 + $0x10] sm:$0xff] %vm483, 0.0
          %487 = vst.msk [vmem:[#allocation4 + $0x18] sm:$0xff] %vm483, 0.0
          %488 = vst.msk [vmem:[#allocation4 + $0x20] sm:$0xff] %vm483, 0.0
          %489 = vst.msk [vmem:[#allocation4 + $0x28] sm:$0xff] %vm483, 0.0
          %490 = vst.msk [vmem:[#allocation4 + $0x30] sm:$0xff] %vm483, 0.0
          %491 = vst.msk [vmem:[#allocation4 + $0x38] sm:$0xff] %vm483, 0.0
        $region97: #{tpu_custom_call.1} parent=88 // pred_fallthru
          _
        %v492 = vld [vmem:[%s444] sm:$0xf]
        %v493 = vld [vmem:[%s444 + $0x4] sm:$0xf]
        %v494 = vld [vmem:[%s444 + $0x8] sm:$0xf]
        %v495 = vld [vmem:[%s444 + $0xc] sm:$0xf]
        %v496 = vld [vmem:[%s444 + $0x10] sm:$0xf]
        %v497 = vld [vmem:[%s444 + $0x14] sm:$0xf]
        %v498 = vld [vmem:[%s444 + $0x18] sm:$0xf]
        %v499 = vld [vmem:[%s444 + $0x1c] sm:$0xf]
        %v500 = vld [vmem:[%s444 + $0x20] sm:$0xf]
        %v501 = vld [vmem:[%s444 + $0x24] sm:$0xf]
        %v502 = vld [vmem:[%s444 + $0x28] sm:$0xf]
        %v503 = vld [vmem:[%s444 + $0x2c] sm:$0xf]
        %v504 = vld [vmem:[%s444 + $0x30] sm:$0xf]
        %v505 = vld [vmem:[%s444 + $0x34] sm:$0xf]
        %v506 = vld [vmem:[%s444 + $0x38] sm:$0xf]
        %v507 = vld [vmem:[%s444 + $0x3c] sm:$0xf]
        %v508 = vunpack.c.l.bf16 %v492
        %v509 = vunpack.c.l.bf16 %v493
        %v510 = vunpack.c.l.bf16 %v494
        %v511 = vunpack.c.l.bf16 %v495
        %v512 = vunpack.c.l.bf16 %v496
        %v513 = vunpack.c.l.bf16 %v497
        %v514 = vunpack.c.l.bf16 %v498
        %v515 = vunpack.c.l.bf16 %v499
        %v516 = vunpack.c.l.bf16 %v500
        %v517 = vunpack.c.l.bf16 %v501
        %v518 = vunpack.c.l.bf16 %v502
        %v519 = vunpack.c.l.bf16 %v503
        %v520 = vunpack.c.l.bf16 %v504
        %v521 = vunpack.c.l.bf16 %v505
        %v522 = vunpack.c.l.bf16 %v506
        %v523 = vunpack.c.l.bf16 %v507
        %vm524 = vcmask 523264
        %v525 = vsel %vm524, %v508, 0.0
        %526 = vadd.xlane.f32.xlu0 %v525
        %v527 = vpop.xlane.xlu0 %526
        %v528 = vsel %vm524, %v509, 0.0
        %529 = vadd.xlane.f32.xlu0 %v528
        %v530 = vpop.xlane.xlu0 %529
        %v531 = vsel %vm524, %v510, 0.0
        %532 = vadd.xlane.f32.xlu0 %v531
        %v533 = vpop.xlane.xlu0 %532
        %v534 = vsel %vm524, %v511, 0.0
        %535 = vadd.xlane.f32.xlu0 %v534
        %v536 = vpop.xlane.xlu0 %535
        %v537 = vsel %vm524, %v512, 0.0
        %538 = vadd.xlane.f32.xlu0 %v537
        %v539 = vpop.xlane.xlu0 %538
        %v540 = vsel %vm524, %v513, 0.0
        %541 = vadd.xlane.f32.xlu0 %v540
        %v542 = vpop.xlane.xlu0 %541
        %v543 = vsel %vm524, %v514, 0.0
        %544 = vadd.xlane.f32.xlu0 %v543
        %v545 = vpop.xlane.xlu0 %544
        %v546 = vsel %vm524, %v515, 0.0
        %547 = vadd.xlane.f32.xlu0 %v546
        %v548 = vpop.xlane.xlu0 %547
        %v549 = vsel %vm524, %v516, 0.0
        %550 = vadd.xlane.f32.xlu0 %v549
        %v551 = vpop.xlane.xlu0 %550
        %v552 = vsel %vm524, %v517, 0.0
        %553 = vadd.xlane.f32.xlu0 %v552
        %v554 = vpop.xlane.xlu0 %553
        %v555 = vsel %vm524, %v518, 0.0
        %556 = vadd.xlane.f32.xlu0 %v555
        %v557 = vpop.xlane.xlu0 %556
        %v558 = vsel %vm524, %v519, 0.0
        %559 = vadd.xlane.f32.xlu0 %v558
        %v560 = vpop.xlane.xlu0 %559
        %v561 = vsel %vm524, %v520, 0.0
        %562 = vadd.xlane.f32.xlu0 %v561
        %v563 = vpop.xlane.xlu0 %562
        %v564 = vsel %vm524, %v521, 0.0
        %565 = vadd.xlane.f32.xlu0 %v564
        %v566 = vpop.xlane.xlu0 %565
        %v567 = vsel %vm524, %v522, 0.0
        %568 = vadd.xlane.f32.xlu0 %v567
        %v569 = vpop.xlane.xlu0 %568
        %v570 = vsel %vm524, %v523, 0.0
        %571 = vadd.xlane.f32.xlu0 %v570
        %v572 = vpop.xlane.xlu0 %571
        %v573 = vrcp.pop 64.0
        %v574 = vmul.f32 %v527, %v573
        %v575 = vmul.f32 %v530, %v573
        %v576 = vmul.f32 %v533, %v573
        %v577 = vmul.f32 %v536, %v573
        %v578 = vmul.f32 %v539, %v573
        %v579 = vmul.f32 %v542, %v573
        %v580 = vmul.f32 %v545, %v573
        %v581 = vmul.f32 %v548, %v573
        %v582 = vmul.f32 %v551, %v573
        %v583 = vmul.f32 %v554, %v573
        %v584 = vmul.f32 %v557, %v573
        %v585 = vmul.f32 %v560, %v573
        %v586 = vmul.f32 %v563, %v573
        %v587 = vmul.f32 %v566, %v573
        %v588 = vmul.f32 %v569, %v573
        %v589 = vmul.f32 %v572, %v573
        %v590 = vsub.f32 %v508, %v574
        %v591 = vsub.f32 %v509, %v575
        %v592 = vsub.f32 %v510, %v576
        %v593 = vsub.f32 %v511, %v577
        %v594 = vsub.f32 %v512, %v578
        %v595 = vsub.f32 %v513, %v579
        %v596 = vsub.f32 %v514, %v580
        %v597 = vsub.f32 %v515, %v581
        %v598 = vsub.f32 %v516, %v582
        %v599 = vsub.f32 %v517, %v583
        %v600 = vsub.f32 %v518, %v584
        %v601 = vsub.f32 %v519, %v585
        %v602 = vsub.f32 %v520, %v586
        %v603 = vsub.f32 %v521, %v587
        %v604 = vsub.f32 %v522, %v588
        %v605 = vsub.f32 %v523, %v589
        %v606 = vmul.f32 %v590, %v590
        %v607 = vmul.f32 %v591, %v591
        %v608 = vmul.f32 %v592, %v592
        %v609 = vmul.f32 %v593, %v593
        %v610 = vmul.f32 %v594, %v594
        %v611 = vmul.f32 %v595, %v595
        %v612 = vmul.f32 %v596, %v596
        %v613 = vmul.f32 %v597, %v597
        %v614 = vmul.f32 %v598, %v598
        %v615 = vmul.f32 %v599, %v599
        %v616 = vmul.f32 %v600, %v600
        %v617 = vmul.f32 %v601, %v601
        %v618 = vmul.f32 %v602, %v602
        %v619 = vmul.f32 %v603, %v603
        %v620 = vmul.f32 %v604, %v604
        %v621 = vmul.f32 %v605, %v605
        %v622 = vsel %vm524, %v606, 0.0
        %623 = vadd.xlane.f32.xlu0 %v622
        %v624 = vpop.xlane.xlu0 %623
        %v625 = vsel %vm524, %v607, 0.0
        %626 = vadd.xlane.f32.xlu0 %v625
        %v627 = vpop.xlane.xlu0 %626
        %v628 = vsel %vm524, %v608, 0.0
        %629 = vadd.xlane.f32.xlu0 %v628
        %v630 = vpop.xlane.xlu0 %629
        %v631 = vsel %vm524, %v609, 0.0
        %632 = vadd.xlane.f32.xlu0 %v631
        %v633 = vpop.xlane.xlu0 %632
        %v634 = vsel %vm524, %v610, 0.0
        %635 = vadd.xlane.f32.xlu0 %v634
        %v636 = vpop.xlane.xlu0 %635
        %v637 = vsel %vm524, %v611, 0.0
        %638 = vadd.xlane.f32.xlu0 %v637
        %v639 = vpop.xlane.xlu0 %638
        %v640 = vsel %vm524, %v612, 0.0
        %641 = vadd.xlane.f32.xlu0 %v640
        %v642 = vpop.xlane.xlu0 %641
        %v643 = vsel %vm524, %v613, 0.0
        %644 = vadd.xlane.f32.xlu0 %v643
        %v645 = vpop.xlane.xlu0 %644
        %v646 = vsel %vm524, %v614, 0.0
        %647 = vadd.xlane.f32.xlu0 %v646
        %v648 = vpop.xlane.xlu0 %647
        %v649 = vsel %vm524, %v615, 0.0
        %650 = vadd.xlane.f32.xlu0 %v649
        %v651 = vpop.xlane.xlu0 %650
        %v652 = vsel %vm524, %v616, 0.0
        %653 = vadd.xlane.f32.xlu0 %v652
        %v654 = vpop.xlane.xlu0 %653
        %v655 = vsel %vm524, %v617, 0.0
        %656 = vadd.xlane.f32.xlu0 %v655
        %v657 = vpop.xlane.xlu0 %656
        %v658 = vsel %vm524, %v618, 0.0
        %659 = vadd.xlane.f32.xlu0 %v658
        %v660 = vpop.xlane.xlu0 %659
        %v661 = vsel %vm524, %v619, 0.0
        %662 = vadd.xlane.f32.xlu0 %v661
        %v663 = vpop.xlane.xlu0 %662
        %v664 = vsel %vm524, %v620, 0.0
        %665 = vadd.xlane.f32.xlu0 %v664
        %v666 = vpop.xlane.xlu0 %665
        %v667 = vsel %vm524, %v621, 0.0
        %668 = vadd.xlane.f32.xlu0 %v667
        %v669 = vpop.xlane.xlu0 %668
        %v670 = vmul.f32 %v624, %v573
        %v671 = vmul.f32 %v627, %v573
        %v672 = vmul.f32 %v630, %v573
        %v673 = vmul.f32 %v633, %v573
        %v674 = vmul.f32 %v636, %v573
        %v675 = vmul.f32 %v639, %v573
        %v676 = vmul.f32 %v642, %v573
        %v677 = vmul.f32 %v645, %v573
        %v678 = vmul.f32 %v648, %v573
        %v679 = vmul.f32 %v651, %v573
        %v680 = vmul.f32 %v654, %v573
        %v681 = vmul.f32 %v657, %v573
        %v682 = vmul.f32 %v660, %v573
        %v683 = vmul.f32 %v663, %v573
        %v684 = vmul.f32 %v666, %v573
        %v685 = vmul.f32 %v669, %v573
        %v686 = vadd.f32 %v670, 1e-05
        %v687 = vadd.f32 %v671, 1e-05
        %v688 = vadd.f32 %v672, 1e-05
        %v689 = vadd.f32 %v673, 1e-05
        %v690 = vadd.f32 %v674, 1e-05
        %v691 = vadd.f32 %v675, 1e-05
        %v692 = vadd.f32 %v676, 1e-05
        %v693 = vadd.f32 %v677, 1e-05
        %v694 = vadd.f32 %v678, 1e-05
        %v695 = vadd.f32 %v679, 1e-05
        %v696 = vadd.f32 %v680, 1e-05
        %v697 = vadd.f32 %v681, 1e-05
        %v698 = vadd.f32 %v682, 1e-05
        %v699 = vadd.f32 %v683, 1e-05
        %v700 = vadd.f32 %v684, 1e-05
        %v701 = vadd.f32 %v685, 1e-05
        %v702 = vrsqrt.pop %v686
        %v703 = vrsqrt.pop %v687
        %v704 = vrsqrt.pop %v688
        %v705 = vrsqrt.pop %v689
        %v706 = vrsqrt.pop %v690
        %v707 = vrsqrt.pop %v691
        %v708 = vrsqrt.pop %v692
        %v709 = vrsqrt.pop %v693
        %v710 = vrsqrt.pop %v694
        %v711 = vrsqrt.pop %v695
        %v712 = vrsqrt.pop %v696
        %v713 = vrsqrt.pop %v697
        %v714 = vrsqrt.pop %v698
        %v715 = vrsqrt.pop %v699
        %v716 = vrsqrt.pop %v700
        %v717 = vrsqrt.pop %v701
        %v718 = vmul.f32 %v590, %v702
        %v719 = vmul.f32 %v591, %v703
        %v720 = vmul.f32 %v592, %v704
        %v721 = vmul.f32 %v593, %v705
        %v722 = vmul.f32 %v594, %v706
        %v723 = vmul.f32 %v595, %v707
        %v724 = vmul.f32 %v596, %v708
        %v725 = vmul.f32 %v597, %v709
        %v726 = vmul.f32 %v598, %v710
        %v727 = vmul.f32 %v599, %v711
        %v728 = vmul.f32 %v600, %v712
        %v729 = vmul.f32 %v601, %v713
        %v730 = vmul.f32 %v602, %v714
        %v731 = vmul.f32 %v603, %v715
        %v732 = vmul.f32 %v604, %v716
        %v733 = vmul.f32 %v605, %v717
        %v734 = vld [vmem:[%s4] sm:$0x1]
        %v736 = vlaneseq
        %v737 = vshrl.u32 %v736, 7
        %v738 = vsub.s32 0, %v737
        %v739 = vrot.slane %v734, %v738
        %v741 = vmul.f32 %v718, %v739
        %v742 = vmul.f32 %v719, %v739
        %v743 = vmul.f32 %v720, %v739
        %v744 = vmul.f32 %v721, %v739
        %v745 = vmul.f32 %v722, %v739
        %v746 = vmul.f32 %v723, %v739
        %v747 = vmul.f32 %v724, %v739
        %v748 = vmul.f32 %v725, %v739
        %v749 = vmul.f32 %v726, %v739
        %v750 = vmul.f32 %v727, %v739
        %v751 = vmul.f32 %v728, %v739
        %v752 = vmul.f32 %v729, %v739
        %v753 = vmul.f32 %v730, %v739
        %v754 = vmul.f32 %v731, %v739
        %v755 = vmul.f32 %v732, %v739
        %v756 = vmul.f32 %v733, %v739
        %v757 = vld [vmem:[%s5] sm:$0x1]
        %v759 = vlaneseq
        %v760 = vshrl.u32 %v759, 7
        %v761 = vsub.s32 0, %v760
        %v762 = vrot.slane %v757, %v761
        %v764 = vadd.f32 %v741, %v762
        %v765 = vadd.f32 %v742, %v762
        %v766 = vadd.f32 %v743, %v762
        %v767 = vadd.f32 %v744, %v762
        %v768 = vadd.f32 %v745, %v762
        %v769 = vadd.f32 %v746, %v762
        %v770 = vadd.f32 %v747, %v762
        %v771 = vadd.f32 %v748, %v762
        %v772 = vadd.f32 %v749, %v762
        %v773 = vadd.f32 %v750, %v762
        %v774 = vadd.f32 %v751, %v762
        %v775 = vadd.f32 %v752, %v762
        %v776 = vadd.f32 %v753, %v762
        %v777 = vadd.f32 %v754, %v762
        %v778 = vadd.f32 %v755, %v762
        %v779 = vadd.f32 %v756, %v762
        %v780 = vpack.c.bf16 %v765, %v764
        %v781 = vpack.c.bf16 %v767, %v766
        %v782 = vpack.c.bf16 %v769, %v768
        %v783 = vpack.c.bf16 %v771, %v770
        %v784 = vpack.c.bf16 %v773, %v772
        %v785 = vpack.c.bf16 %v775, %v774
        %v786 = vpack.c.bf16 %v777, %v776
        %v787 = vpack.c.bf16 %v779, %v778
        %v788 = vld [vmem:[%s454] sm:$0xf]
        %v789 = vld [vmem:[%s454 + $0x4] sm:$0xf]
        %v790 = vld [vmem:[%s454 + $0x8] sm:$0xf]
        %v791 = vld [vmem:[%s454 + $0xc] sm:$0xf]
        %v792 = vld [vmem:[%s454 + $0x10] sm:$0xf]
        %v793 = vld [vmem:[%s454 + $0x14] sm:$0xf]
        %v794 = vld [vmem:[%s454 + $0x18] sm:$0xf]
        %v795 = vld [vmem:[%s454 + $0x1c] sm:$0xf]
        %v796 = vld [vmem:[%s454 + $0x20] sm:$0xf]
        %v797 = vld [vmem:[%s454 + $0x24] sm:$0xf]
        %v798 = vld [vmem:[%s454 + $0x28] sm:$0xf]
        %v799 = vld [vmem:[%s454 + $0x2c] sm:$0xf]
        %v800 = vld [vmem:[%s454 + $0x30] sm:$0xf]
        %v801 = vld [vmem:[%s454 + $0x34] sm:$0xf]
        %v802 = vld [vmem:[%s454 + $0x38] sm:$0xf]
        %v803 = vld [vmem:[%s454 + $0x3c] sm:$0xf]
        %v804 = vunpack.c.l.bf16 %v788
        %v805 = vunpack.c.l.bf16 %v789
        %v806 = vunpack.c.l.bf16 %v790
        %v807 = vunpack.c.l.bf16 %v791
        %v808 = vunpack.c.l.bf16 %v792
        %v809 = vunpack.c.l.bf16 %v793
        %v810 = vunpack.c.l.bf16 %v794
        %v811 = vunpack.c.l.bf16 %v795
        %v812 = vunpack.c.l.bf16 %v796
        %v813 = vunpack.c.l.bf16 %v797
        %v814 = vunpack.c.l.bf16 %v798
        %v815 = vunpack.c.l.bf16 %v799
        %v816 = vunpack.c.l.bf16 %v800
        %v817 = vunpack.c.l.bf16 %v801
        %v818 = vunpack.c.l.bf16 %v802
        %v819 = vunpack.c.l.bf16 %v803
        %v820 = vsel %vm524, %v804, 0.0
        %821 = vadd.xlane.f32.xlu0 %v820
        %v822 = vpop.xlane.xlu0 %821
        %v823 = vsel %vm524, %v805, 0.0
        %824 = vadd.xlane.f32.xlu0 %v823
        %v825 = vpop.xlane.xlu0 %824
        %v826 = vsel %vm524, %v806, 0.0
        %827 = vadd.xlane.f32.xlu0 %v826
        %v828 = vpop.xlane.xlu0 %827
        %v829 = vsel %vm524, %v807, 0.0
        %830 = vadd.xlane.f32.xlu0 %v829
        %v831 = vpop.xlane.xlu0 %830
        %v832 = vsel %vm524, %v808, 0.0
        %833 = vadd.xlane.f32.xlu0 %v832
        %v834 = vpop.xlane.xlu0 %833
        %v835 = vsel %vm524, %v809, 0.0
        %836 = vadd.xlane.f32.xlu0 %v835
        %v837 = vpop.xlane.xlu0 %836
        %v838 = vsel %vm524, %v810, 0.0
        %839 = vadd.xlane.f32.xlu0 %v838
        %v840 = vpop.xlane.xlu0 %839
        %v841 = vsel %vm524, %v811, 0.0
        %842 = vadd.xlane.f32.xlu0 %v841
        %v843 = vpop.xlane.xlu0 %842
        %v844 = vsel %vm524, %v812, 0.0
        %845 = vadd.xlane.f32.xlu0 %v844
        %v846 = vpop.xlane.xlu0 %845
        %v847 = vsel %vm524, %v813, 0.0
        %848 = vadd.xlane.f32.xlu0 %v847
        %v849 = vpop.xlane.xlu0 %848
        %v850 = vsel %vm524, %v814, 0.0
        %851 = vadd.xlane.f32.xlu0 %v850
        %v852 = vpop.xlane.xlu0 %851
        %v853 = vsel %vm524, %v815, 0.0
        %854 = vadd.xlane.f32.xlu0 %v853
        %v855 = vpop.xlane.xlu0 %854
        %v856 = vsel %vm524, %v816, 0.0
        %857 = vadd.xlane.f32.xlu0 %v856
        %v858 = vpop.xlane.xlu0 %857
        %v859 = vsel %vm524, %v817, 0.0
        %860 = vadd.xlane.f32.xlu0 %v859
        %v861 = vpop.xlane.xlu0 %860
        %v862 = vsel %vm524, %v818, 0.0
        %863 = vadd.xlane.f32.xlu0 %v862
        %v864 = vpop.xlane.xlu0 %863
        %v865 = vsel %vm524, %v819, 0.0
        %866 = vadd.xlane.f32.xlu0 %v865
        %v867 = vpop.xlane.xlu0 %866
        %v868 = vmul.f32 %v822, %v573
        %v869 = vmul.f32 %v825, %v573
        %v870 = vmul.f32 %v828, %v573
        %v871 = vmul.f32 %v831, %v573
        %v872 = vmul.f32 %v834, %v573
        %v873 = vmul.f32 %v837, %v573
        %v874 = vmul.f32 %v840, %v573
        %v875 = vmul.f32 %v843, %v573
        %v876 = vmul.f32 %v846, %v573
        %v877 = vmul.f32 %v849, %v573
        %v878 = vmul.f32 %v852, %v573
        %v879 = vmul.f32 %v855, %v573
        %v880 = vmul.f32 %v858, %v573
        %v881 = vmul.f32 %v861, %v573
        %v882 = vmul.f32 %v864, %v573
        %v883 = vmul.f32 %v867, %v573
        %v884 = vsub.f32 %v804, %v868
        %v885 = vsub.f32 %v805, %v869
        %v886 = vsub.f32 %v806, %v870
        %v887 = vsub.f32 %v807, %v871
        %v888 = vsub.f32 %v808, %v872
        %v889 = vsub.f32 %v809, %v873
        %v890 = vsub.f32 %v810, %v874
        %v891 = vsub.f32 %v811, %v875
        %v892 = vsub.f32 %v812, %v876
        %v893 = vsub.f32 %v813, %v877
        %v894 = vsub.f32 %v814, %v878
        %v895 = vsub.f32 %v815, %v879
        %v896 = vsub.f32 %v816, %v880
        %v897 = vsub.f32 %v817, %v881
        %v898 = vsub.f32 %v818, %v882
        %v899 = vsub.f32 %v819, %v883
        %v900 = vmul.f32 %v884, %v884
        %v901 = vmul.f32 %v885, %v885
        %v902 = vmul.f32 %v886, %v886
        %v903 = vmul.f32 %v887, %v887
        %v904 = vmul.f32 %v888, %v888
        %v905 = vmul.f32 %v889, %v889
        %v906 = vmul.f32 %v890, %v890
        %v907 = vmul.f32 %v891, %v891
        %v908 = vmul.f32 %v892, %v892
        %v909 = vmul.f32 %v893, %v893
        %v910 = vmul.f32 %v894, %v894
        %v911 = vmul.f32 %v895, %v895
        %v912 = vmul.f32 %v896, %v896
        %v913 = vmul.f32 %v897, %v897
        %v914 = vmul.f32 %v898, %v898
        %v915 = vmul.f32 %v899, %v899
        %v916 = vsel %vm524, %v900, 0.0
        %917 = vadd.xlane.f32.xlu0 %v916
        %v918 = vpop.xlane.xlu0 %917
        %v919 = vsel %vm524, %v901, 0.0
        %920 = vadd.xlane.f32.xlu0 %v919
        %v921 = vpop.xlane.xlu0 %920
        %v922 = vsel %vm524, %v902, 0.0
        %923 = vadd.xlane.f32.xlu0 %v922
        %v924 = vpop.xlane.xlu0 %923
        %v925 = vsel %vm524, %v903, 0.0
        %926 = vadd.xlane.f32.xlu0 %v925
        %v927 = vpop.xlane.xlu0 %926
        %v928 = vsel %vm524, %v904, 0.0
        %929 = vadd.xlane.f32.xlu0 %v928
        %v930 = vpop.xlane.xlu0 %929
        %v931 = vsel %vm524, %v905, 0.0
        %932 = vadd.xlane.f32.xlu0 %v931
        %v933 = vpop.xlane.xlu0 %932
        %v934 = vsel %vm524, %v906, 0.0
        %935 = vadd.xlane.f32.xlu0 %v934
        %v936 = vpop.xlane.xlu0 %935
        %v937 = vsel %vm524, %v907, 0.0
        %938 = vadd.xlane.f32.xlu0 %v937
        %v939 = vpop.xlane.xlu0 %938
        %v940 = vsel %vm524, %v908, 0.0
        %941 = vadd.xlane.f32.xlu0 %v940
        %v942 = vpop.xlane.xlu0 %941
        %v943 = vsel %vm524, %v909, 0.0
        %944 = vadd.xlane.f32.xlu0 %v943
        %v945 = vpop.xlane.xlu0 %944
        %v946 = vsel %vm524, %v910, 0.0
        %947 = vadd.xlane.f32.xlu0 %v946
        %v948 = vpop.xlane.xlu0 %947
        %v949 = vsel %vm524, %v911, 0.0
        %950 = vadd.xlane.f32.xlu0 %v949
        %v951 = vpop.xlane.xlu0 %950
        %v952 = vsel %vm524, %v912, 0.0
        %953 = vadd.xlane.f32.xlu0 %v952
        %v954 = vpop.xlane.xlu0 %953
        %v955 = vsel %vm524, %v913, 0.0
        %956 = vadd.xlane.f32.xlu0 %v955
        %v957 = vpop.xlane.xlu0 %956
        %v958 = vsel %vm524, %v914, 0.0
        %959 = vadd.xlane.f32.xlu0 %v958
        %v960 = vpop.xlane.xlu0 %959
        %v961 = vsel %vm524, %v915, 0.0
        %962 = vadd.xlane.f32.xlu0 %v961
        %v963 = vpop.xlane.xlu0 %962
        %v964 = vmul.f32 %v918, %v573
        %v965 = vmul.f32 %v921, %v573
        %v966 = vmul.f32 %v924, %v573
        %v967 = vmul.f32 %v927, %v573
        %v968 = vmul.f32 %v930, %v573
        %v969 = vmul.f32 %v933, %v573
        %v970 = vmul.f32 %v936, %v573
        %v971 = vmul.f32 %v939, %v573
        %v972 = vmul.f32 %v942, %v573
        %v973 = vmul.f32 %v945, %v573
        %v974 = vmul.f32 %v948, %v573
        %v975 = vmul.f32 %v951, %v573
        %v976 = vmul.f32 %v954, %v573
        %v977 = vmul.f32 %v957, %v573
        %v978 = vmul.f32 %v960, %v573
        %v979 = vmul.f32 %v963, %v573
        %v980 = vadd.f32 %v964, 1e-05
        %v981 = vadd.f32 %v965, 1e-05
        %v982 = vadd.f32 %v966, 1e-05
        %v983 = vadd.f32 %v967, 1e-05
        %v984 = vadd.f32 %v968, 1e-05
        %v985 = vadd.f32 %v969, 1e-05
        %v986 = vadd.f32 %v970, 1e-05
        %v987 = vadd.f32 %v971, 1e-05
        %v988 = vadd.f32 %v972, 1e-05
        %v989 = vadd.f32 %v973, 1e-05
        %v990 = vadd.f32 %v974, 1e-05
        %v991 = vadd.f32 %v975, 1e-05
        %v992 = vadd.f32 %v976, 1e-05
        %v993 = vadd.f32 %v977, 1e-05
        %v994 = vadd.f32 %v978, 1e-05
        %v995 = vadd.f32 %v979, 1e-05
        %v996 = vrsqrt.pop %v980
        %v997 = vrsqrt.pop %v981
        %v998 = vrsqrt.pop %v982
        %v999 = vrsqrt.pop %v983
        %v1000 = vrsqrt.pop %v984
        %v1001 = vrsqrt.pop %v985
        %v1002 = vrsqrt.pop %v986
        %v1003 = vrsqrt.pop %v987
        %v1004 = vrsqrt.pop %v988
        %v1005 = vrsqrt.pop %v989
        %v1006 = vrsqrt.pop %v990
        %v1007 = vrsqrt.pop %v991
        %v1008 = vrsqrt.pop %v992
        %v1009 = vrsqrt.pop %v993
        %v1010 = vrsqrt.pop %v994
        %v1011 = vrsqrt.pop %v995
        %v1012 = vmul.f32 %v884, %v996
        %v1013 = vmul.f32 %v885, %v997
        %v1014 = vmul.f32 %v886, %v998
        %v1015 = vmul.f32 %v887, %v999
        %v1016 = vmul.f32 %v888, %v1000
        %v1017 = vmul.f32 %v889, %v1001
        %v1018 = vmul.f32 %v890, %v1002
        %v1019 = vmul.f32 %v891, %v1003
        %v1020 = vmul.f32 %v892, %v1004
        %v1021 = vmul.f32 %v893, %v1005
        %v1022 = vmul.f32 %v894, %v1006
        %v1023 = vmul.f32 %v895, %v1007
        %v1024 = vmul.f32 %v896, %v1008
        %v1025 = vmul.f32 %v897, %v1009
        %v1026 = vmul.f32 %v898, %v1010
        %v1027 = vmul.f32 %v899, %v1011
        %v1028 = vld [vmem:[%s6] sm:$0x1]
        %v1030 = vlaneseq
        %v1031 = vshrl.u32 %v1030, 7
        %v1032 = vsub.s32 0, %v1031
        %v1033 = vrot.slane %v1028, %v1032
        %v1035 = vmul.f32 %v1012, %v1033
        %v1036 = vmul.f32 %v1013, %v1033
        %v1037 = vmul.f32 %v1014, %v1033
        %v1038 = vmul.f32 %v1015, %v1033
        %v1039 = vmul.f32 %v1016, %v1033
        %v1040 = vmul.f32 %v1017, %v1033
        %v1041 = vmul.f32 %v1018, %v1033
        %v1042 = vmul.f32 %v1019, %v1033
        %v1043 = vmul.f32 %v1020, %v1033
        %v1044 = vmul.f32 %v1021, %v1033
        %v1045 = vmul.f32 %v1022, %v1033
        %v1046 = vmul.f32 %v1023, %v1033
        %v1047 = vmul.f32 %v1024, %v1033
        %v1048 = vmul.f32 %v1025, %v1033
        %v1049 = vmul.f32 %v1026, %v1033
        %v1050 = vmul.f32 %v1027, %v1033
        %v1051 = vld [vmem:[%s7] sm:$0x1]
        %v1053 = vlaneseq
        %v1054 = vshrl.u32 %v1053, 7
        %v1055 = vsub.s32 0, %v1054
        %v1056 = vrot.slane %v1051, %v1055
        %v1058 = vadd.f32 %v1035, %v1056
        %v1059 = vadd.f32 %v1036, %v1056
        %v1060 = vadd.f32 %v1037, %v1056
        %v1061 = vadd.f32 %v1038, %v1056
        %v1062 = vadd.f32 %v1039, %v1056
        %v1063 = vadd.f32 %v1040, %v1056
        %v1064 = vadd.f32 %v1041, %v1056
        %v1065 = vadd.f32 %v1042, %v1056
        %v1066 = vadd.f32 %v1043, %v1056
        %v1067 = vadd.f32 %v1044, %v1056
        %v1068 = vadd.f32 %v1045, %v1056
        %v1069 = vadd.f32 %v1046, %v1056
        %v1070 = vadd.f32 %v1047, %v1056
        %v1071 = vadd.f32 %v1048, %v1056
        %v1072 = vadd.f32 %v1049, %v1056
        %v1073 = vadd.f32 %v1050, %v1056
        %v1074 = vpack.c.bf16 %v1059, %v1058
        %v1075 = vpack.c.bf16 %v1061, %v1060
        %v1076 = vpack.c.bf16 %v1063, %v1062
        %v1077 = vpack.c.bf16 %v1065, %v1064
        %v1078 = vpack.c.bf16 %v1067, %v1066
        %v1079 = vpack.c.bf16 %v1069, %v1068
        %v1080 = vpack.c.bf16 %v1071, %v1070
        %v1081 = vpack.c.bf16 %v1073, %v1072
        %v1082 = vld [vmem:[%s435] sm:$0xf]
        %v1083 = vld [vmem:[%s435 + $0x4] sm:$0xf]
        %v1084 = vld [vmem:[%s435 + $0x8] sm:$0xf]
        %v1085 = vld [vmem:[%s435 + $0xc] sm:$0xf]
        %v1086 = vld [vmem:[%s435 + $0x10] sm:$0xf]
        %v1087 = vld [vmem:[%s435 + $0x14] sm:$0xf]
        %v1088 = vld [vmem:[%s435 + $0x18] sm:$0xf]
        %v1089 = vld [vmem:[%s435 + $0x1c] sm:$0xf]
        %v1090 = vld [vmem:[%s377] sm:$0xf]
        %v1091 = vld [vmem:[%s377 + $0x4] sm:$0xf]
        %v1092 = vunpack.c.l.bf16 %v1090
        %v1093 = vunpack.c.l.bf16 %v1091
        %v1102 = vunpack.c.l.b16 %v1082
        %v1103 = vunpack.c.l.b16 %v1083
        %v1104 = vunpack.c.l.b16 %v1084
        %v1105 = vunpack.c.l.b16 %v1085
        %v1106 = vunpack.c.l.b16 %v1086
        %v1107 = vunpack.c.l.b16 %v1087
        %v1108 = vunpack.c.l.b16 %v1088
        %v1109 = vunpack.c.l.b16 %v1089
        %v1110 = vpack.c.b16 %v1103, %v1102
        %v1111 = vpack.c.b16 %v1105, %v1104
        %v1112 = vpack.c.b16 %v1107, %v1106
        %v1113 = vpack.c.b16 %v1109, %v1108
        %v1115 = vsel %vm524, %v1110, 0
        %v1118 = vsel %vm524, %v1111, 0
        %v1121 = vsel %vm524, %v1112, 0
        %v1124 = vsel %vm524, %v1113, 0
        %v1127 = vsel %vm524, %v780, 0
        %v1130 = vsel %vm524, %v781, 0
        %v1133 = vsel %vm524, %v782, 0
        %v1136 = vsel %vm524, %v783, 0
        %v1139 = vsel %vm524, %v784, 0
        %v1142 = vsel %vm524, %v785, 0
        %v1145 = vsel %vm524, %v786, 0
        %v1148 = vsel %vm524, %v787, 0
        %1150 = vmatprep.subr.bf16.mxu0 0
        %1151 = vmatpush1.bf16.xpose.msra.mxu0 %v1148
        %1152 = vmatprep.subr.bf16.mxu0 0
        %1153 = vmatpush1.bf16.xpose.msra.mxu0 %v1145
        %1154 = vmatprep.subr.bf16.mxu0 0
        %1155 = vmatpush1.bf16.xpose.msra.mxu0 %v1142
        %1156 = vmatprep.subr.bf16.mxu0 0
        %1157 = vmatpush1.bf16.xpose.msra.mxu0 %v1139
        %1158 = vmatprep.subr.bf16.mxu0 0
        %1159 = vmatpush1.bf16.xpose.msra.mxu0 %v1136
        %1160 = vmatprep.subr.bf16.mxu0 0
        %1161 = vmatpush1.bf16.xpose.msra.mxu0 %v1133
        %1162 = vmatprep.subr.bf16.mxu0 0
        %1163 = vmatpush1.bf16.xpose.msra.mxu0 %v1130
        %1164 = vmatprep.subr.bf16.mxu0 0
        %1165 = vmatpush1.bf16.xpose.msra.mxu0 %v1127
        %1166 = vmatprep.subr.bf16.mxu0 0
        %1167 = vmatpush2.bf16.xpose.msra.mxu0 0
        %1168 = vmatprep.subr.bf16.mxu0 0
        %1169 = vmatpush2.bf16.xpose.msra.mxu0 0
        %1170 = vmatprep.subr.bf16.mxu0 0
        %1171 = vmatpush2.bf16.xpose.msra.mxu0 0
        %1172 = vmatprep.subr.bf16.mxu0 0
        %1173 = vmatpush2.bf16.xpose.msra.mxu0 0
        %1174 = vmatprep.subr.bf16.mxu0 0
        %1175 = vmatpush2.bf16.xpose.msra.mxu0 0
        %1176 = vmatprep.subr.bf16.mxu0 0
        %1177 = vmatpush2.bf16.xpose.msra.mxu0 0
        %1178 = vmatprep.subr.bf16.mxu0 0
        %1179 = vmatpush2.bf16.xpose.msra.mxu0 0
        %1180 = vmatprep.subr.bf16.mxu0 0
        %1181 = vmatpush2.bf16.xpose.msra.mxu0 0
        %1182 = vmatprep.mubr.bf16.mxu0 0
        %1183 = vmatmul.mubr.bf16.gmra.mxu0 %v1115
        %v1184 = vpop.f32.mrf.mxu0
        %v1185 = vadd.f32 %v1092, %v1184
        %v1186 = vpop.f32.mrf.mxu0
        %v1187 = vpop.f32.mrf.mxu0
        %v1188 = vadd.f32 %v1093, %v1187
        %v1189 = vpop.f32.mrf.mxu0
        %1190 = vmatprep.mubr.bf16.mxu0 0
        %1191 = vmatmul.mubr.bf16.gmra.mxu0 %v1118
        %v1192 = vpop.f32.mrf.mxu0
        %v1193 = vadd.f32 %v1092, %v1192
        %v1194 = vpop.f32.mrf.mxu0
        %v1195 = vpop.f32.mrf.mxu0
        %v1196 = vadd.f32 %v1093, %v1195
        %v1197 = vpop.f32.mrf.mxu0
        %1198 = vmatprep.mubr.bf16.mxu0 0
        %1199 = vmatmul.mubr.bf16.gmra.mxu0 %v1121
        %v1200 = vpop.f32.mrf.mxu0
        %v1201 = vadd.f32 %v1092, %v1200
        %v1202 = vpop.f32.mrf.mxu0
        %v1203 = vpop.f32.mrf.mxu0
        %v1204 = vadd.f32 %v1093, %v1203
        %v1205 = vpop.f32.mrf.mxu0
        %1206 = vmatprep.mubr.bf16.mxu0 0
        %1207 = vmatmul.mubr.bf16.gmra.mxu0 %v1124
        %v1208 = vpop.f32.mrf.mxu0
        %v1209 = vadd.f32 %v1092, %v1208
        %v1210 = vpop.f32.mrf.mxu0
        %v1211 = vpop.f32.mrf.mxu0
        %v1212 = vadd.f32 %v1093, %v1211
        %v1213 = vpop.f32.mrf.mxu0
        %1214 = vdwg.mxu0
        %v1215 = vld [vmem:[#allocation2] sm:$0xff]
        %v1216 = vld [vmem:[#allocation2 + $0x8] sm:$0xff]
        %v1217 = vld [vmem:[#allocation2 + $0x10] sm:$0xff]
        %v1218 = vld [vmem:[#allocation2 + $0x18] sm:$0xff]
        %v1219 = vld [vmem:[#allocation2 + $0x20] sm:$0xff]
        %v1220 = vld [vmem:[#allocation2 + $0x28] sm:$0xff]
        %v1221 = vld [vmem:[#allocation2 + $0x30] sm:$0xff]
        %v1222 = vld [vmem:[#allocation2 + $0x38] sm:$0xff]
        %1223 = vmax.xlane.f32.xlu0 %v1185
        %v1224 = vpop.xlane.xlu0 %1223
        %1225 = vmax.xlane.f32.xlu0 %v1188
        %v1226 = vpop.xlane.xlu0 %1225
        %1227 = vmax.xlane.f32.xlu0 %v1193
        %v1228 = vpop.xlane.xlu0 %1227
        %1229 = vmax.xlane.f32.xlu0 %v1196
        %v1230 = vpop.xlane.xlu0 %1229
        %1231 = vmax.xlane.f32.xlu0 %v1201
        %v1232 = vpop.xlane.xlu0 %1231
        %1233 = vmax.xlane.f32.xlu0 %v1204
        %v1234 = vpop.xlane.xlu0 %1233
        %1235 = vmax.xlane.f32.xlu0 %v1209
        %v1236 = vpop.xlane.xlu0 %1235
        %1237 = vmax.xlane.f32.xlu0 %v1212
        %v1238 = vpop.xlane.xlu0 %1237
        %v1239 = vmax.f32 %v1215, %v1224
        %v1240 = vmax.f32 %v1216, %v1226
        %v1241 = vmax.f32 %v1217, %v1228
        %v1242 = vmax.f32 %v1218, %v1230
        %v1243 = vmax.f32 %v1219, %v1232
        %v1244 = vmax.f32 %v1220, %v1234
        %v1245 = vmax.f32 %v1221, %v1236
        %v1246 = vmax.f32 %v1222, %v1238
        %v1247 = vsub.f32 %v1215, %v1239
        %v1248 = vsub.f32 %v1216, %v1240
        %v1249 = vsub.f32 %v1217, %v1241
        %v1250 = vsub.f32 %v1218, %v1242
        %v1251 = vsub.f32 %v1219, %v1243
        %v1252 = vsub.f32 %v1220, %v1244
        %v1253 = vsub.f32 %v1221, %v1245
        %v1254 = vsub.f32 %v1222, %v1246
        %v1255 = vmul.f32 %v1247, 1.442695
        %v1256 = vpow.pop %v1255
        %v1257 = vmul.f32 %v1248, 1.442695
        %v1258 = vpow.pop %v1257
        %v1259 = vmul.f32 %v1249, 1.442695
        %v1260 = vpow.pop %v1259
        %v1261 = vmul.f32 %v1250, 1.442695
        %v1262 = vpow.pop %v1261
        %v1263 = vmul.f32 %v1251, 1.442695
        %v1264 = vpow.pop %v1263
        %v1265 = vmul.f32 %v1252, 1.442695
        %v1266 = vpow.pop %v1265
        %v1267 = vmul.f32 %v1253, 1.442695
        %v1268 = vpow.pop %v1267
        %v1269 = vmul.f32 %v1254, 1.442695
        %v1270 = vpow.pop %v1269
        %1272 = vset.pattern.permute.xlu0 0
        %1273 = vperm.xlu0 %1272, %v1239
        %v1274 = vpop.permute.xlu0 %1273
        %1277 = vset.pattern.permute.xlu0 0
        %1278 = vperm.xlu0 %1277, %v1240
        %v1279 = vpop.permute.xlu0 %1278
        %1282 = vset.pattern.permute.xlu0 0
        %1283 = vperm.xlu0 %1282, %v1241
        %v1284 = vpop.permute.xlu0 %1283
        %1287 = vset.pattern.permute.xlu0 0
        %1288 = vperm.xlu0 %1287, %v1242
        %v1289 = vpop.permute.xlu0 %1288
        %1292 = vset.pattern.permute.xlu0 0
        %1293 = vperm.xlu0 %1292, %v1243
        %v1294 = vpop.permute.xlu0 %1293
        %1297 = vset.pattern.permute.xlu0 0
        %1298 = vperm.xlu0 %1297, %v1244
        %v1299 = vpop.permute.xlu0 %1298
        %1302 = vset.pattern.permute.xlu0 0
        %1303 = vperm.xlu0 %1302, %v1245
        %v1304 = vpop.permute.xlu0 %1303
        %1307 = vset.pattern.permute.xlu0 0
        %1308 = vperm.xlu0 %1307, %v1246
        %v1309 = vpop.permute.xlu0 %1308
        %v1311 = vsub.f32 %v1185, %v1274
        %v1312 = vsub.f32 %v1188, %v1279
        %v1313 = vsub.f32 %v1193, %v1284
        %v1314 = vsub.f32 %v1196, %v1289
        %v1315 = vsub.f32 %v1201, %v1294
        %v1316 = vsub.f32 %v1204, %v1299
        %v1317 = vsub.f32 %v1209, %v1304
        %v1318 = vsub.f32 %v1212, %v1309
        %v1319 = vmul.f32 %v1311, 1.442695
        %v1320 = vpow.pop %v1319
        %v1321 = vmul.f32 %v1312, 1.442695
        %v1322 = vpow.pop %v1321
        %v1323 = vmul.f32 %v1313, 1.442695
        %v1324 = vpow.pop %v1323
        %v1325 = vmul.f32 %v1314, 1.442695
        %v1326 = vpow.pop %v1325
        %v1327 = vmul.f32 %v1315, 1.442695
        %v1328 = vpow.pop %v1327
        %v1329 = vmul.f32 %v1316, 1.442695
        %v1330 = vpow.pop %v1329
        %v1331 = vmul.f32 %v1317, 1.442695
        %v1332 = vpow.pop %v1331
        %v1333 = vmul.f32 %v1318, 1.442695
        %v1334 = vpow.pop %v1333
        %v1335 = vld [vmem:[#allocation3] sm:$0xff]
        %v1336 = vld [vmem:[#allocation3 + $0x8] sm:$0xff]
        %v1337 = vld [vmem:[#allocation3 + $0x10] sm:$0xff]
        %v1338 = vld [vmem:[#allocation3 + $0x18] sm:$0xff]
        %v1339 = vld [vmem:[#allocation3 + $0x20] sm:$0xff]
        %v1340 = vld [vmem:[#allocation3 + $0x28] sm:$0xff]
        %v1341 = vld [vmem:[#allocation3 + $0x30] sm:$0xff]
        %v1342 = vld [vmem:[#allocation3 + $0x38] sm:$0xff]
        %v1343 = vmul.f32 %v1256, %v1335
        %v1344 = vmul.f32 %v1258, %v1336
        %v1345 = vmul.f32 %v1260, %v1337
        %v1346 = vmul.f32 %v1262, %v1338
        %v1347 = vmul.f32 %v1264, %v1339
        %v1348 = vmul.f32 %v1266, %v1340
        %v1349 = vmul.f32 %v1268, %v1341
        %v1350 = vmul.f32 %v1270, %v1342
        %1351 = vadd.xlane.f32.xlu0 %v1320
        %v1352 = vpop.xlane.xlu0 %1351
        %1353 = vadd.xlane.f32.xlu0 %v1322
        %v1354 = vpop.xlane.xlu0 %1353
        %1355 = vadd.xlane.f32.xlu0 %v1324
        %v1356 = vpop.xlane.xlu0 %1355
        %1357 = vadd.xlane.f32.xlu0 %v1326
        %v1358 = vpop.xlane.xlu0 %1357
        %1359 = vadd.xlane.f32.xlu0 %v1328
        %v1360 = vpop.xlane.xlu0 %1359
        %1361 = vadd.xlane.f32.xlu0 %v1330
        %v1362 = vpop.xlane.xlu0 %1361
        %1363 = vadd.xlane.f32.xlu0 %v1332
        %v1364 = vpop.xlane.xlu0 %1363
        %1365 = vadd.xlane.f32.xlu0 %v1334
        %v1366 = vpop.xlane.xlu0 %1365
        %v1367 = vadd.f32 %v1343, %v1352
        %v1368 = vadd.f32 %v1344, %v1354
        %v1369 = vadd.f32 %v1345, %v1356
        %v1370 = vadd.f32 %v1346, %v1358
        %v1371 = vadd.f32 %v1347, %v1360
        %v1372 = vadd.f32 %v1348, %v1362
        %v1373 = vadd.f32 %v1349, %v1364
        %v1374 = vadd.f32 %v1350, %v1366
        %vm1375 = vcmask 7168
        %1376 = vst.msk [vmem:[#allocation3] sm:$0xff] %vm1375, %v1367
        %1377 = vst.msk [vmem:[#allocation3 + $0x8] sm:$0xff] %vm1375, %v1368
        %1378 = vst.msk [vmem:[#allocation3 + $0x10] sm:$0xff] %vm1375, %v1369
        %1379 = vst.msk [vmem:[#allocation3 + $0x18] sm:$0xff] %vm1375, %v1370
        %1380 = vst.msk [vmem:[#allocation3 + $0x20] sm:$0xff] %vm1375, %v1371
        %1381 = vst.msk [vmem:[#allocation3 + $0x28] sm:$0xff] %vm1375, %v1372
        %1382 = vst.msk [vmem:[#allocation3 + $0x30] sm:$0xff] %vm1375, %v1373
        %1383 = vst.msk [vmem:[#allocation3 + $0x38] sm:$0xff] %vm1375, %v1374
        %1384 = vst.msk [vmem:[#allocation2] sm:$0xff] %vm1375, %v1239
        %1385 = vst.msk [vmem:[#allocation2 + $0x8] sm:$0xff] %vm1375, %v1240
        %1386 = vst.msk [vmem:[#allocation2 + $0x10] sm:$0xff] %vm1375, %v1241
        %1387 = vst.msk [vmem:[#allocation2 + $0x18] sm:$0xff] %vm1375, %v1242
        %1388 = vst.msk [vmem:[#allocation2 + $0x20] sm:$0xff] %vm1375, %v1243
        %1389 = vst.msk [vmem:[#allocation2 + $0x28] sm:$0xff] %vm1375, %v1244
        %1390 = vst.msk [vmem:[#allocation2 + $0x30] sm:$0xff] %vm1375, %v1245
        %1391 = vst.msk [vmem:[#allocation2 + $0x38] sm:$0xff] %vm1375, %v1246
        %v1392 = vld [vmem:[#allocation4] sm:$0xff]
        %v1393 = vld [vmem:[#allocation4 + $0x8] sm:$0xff]
        %v1394 = vld [vmem:[#allocation4 + $0x10] sm:$0xff]
        %v1395 = vld [vmem:[#allocation4 + $0x18] sm:$0xff]
        %v1396 = vld [vmem:[#allocation4 + $0x20] sm:$0xff]
        %v1397 = vld [vmem:[#allocation4 + $0x28] sm:$0xff]
        %v1398 = vld [vmem:[#allocation4 + $0x30] sm:$0xff]
        %v1399 = vld [vmem:[#allocation4 + $0x38] sm:$0xff]
        %1401 = vset.pattern.permute.xlu0 0
        %1402 = vperm.xlu0 %1401, %v1256
        %v1403 = vpop.permute.xlu0 %1402
        %1406 = vset.pattern.permute.xlu0 0
        %1407 = vperm.xlu0 %1406, %v1258
        %v1408 = vpop.permute.xlu0 %1407
        %1411 = vset.pattern.permute.xlu0 0
        %1412 = vperm.xlu0 %1411, %v1260
        %v1413 = vpop.permute.xlu0 %1412
        %1416 = vset.pattern.permute.xlu0 0
        %1417 = vperm.xlu0 %1416, %v1262
        %v1418 = vpop.permute.xlu0 %1417
        %1421 = vset.pattern.permute.xlu0 0
        %1422 = vperm.xlu0 %1421, %v1264
        %v1423 = vpop.permute.xlu0 %1422
        %1426 = vset.pattern.permute.xlu0 0
        %1427 = vperm.xlu0 %1426, %v1266
        %v1428 = vpop.permute.xlu0 %1427
        %1431 = vset.pattern.permute.xlu0 0
        %1432 = vperm.xlu0 %1431, %v1268
        %v1433 = vpop.permute.xlu0 %1432
        %1436 = vset.pattern.permute.xlu0 0
        %1437 = vperm.xlu0 %1436, %v1270
        %v1438 = vpop.permute.xlu0 %1437
        %v1440 = vmul.f32 %v1403, %v1392
        %v1441 = vmul.f32 %v1408, %v1393
        %v1442 = vmul.f32 %v1413, %v1394
        %v1443 = vmul.f32 %v1418, %v1395
        %v1444 = vmul.f32 %v1423, %v1396
        %v1445 = vmul.f32 %v1428, %v1397
        %v1446 = vmul.f32 %v1433, %v1398
        %v1447 = vmul.f32 %v1438, %v1399
        %vm1448 = vcmask 130048
        %1449 = vst.msk [vmem:[#allocation4] sm:$0xff] %vm1448, %v1440
        %1450 = vst.msk [vmem:[#allocation4 + $0x8] sm:$0xff] %vm1448, %v1441
        %1451 = vst.msk [vmem:[#allocation4 + $0x10] sm:$0xff] %vm1448, %v1442
        %1452 = vst.msk [vmem:[#allocation4 + $0x18] sm:$0xff] %vm1448, %v1443
        %1453 = vst.msk [vmem:[#allocation4 + $0x20] sm:$0xff] %vm1448, %v1444
        %1454 = vst.msk [vmem:[#allocation4 + $0x28] sm:$0xff] %vm1448, %v1445
        %1455 = vst.msk [vmem:[#allocation4 + $0x30] sm:$0xff] %vm1448, %v1446
        %1456 = vst.msk [vmem:[#allocation4 + $0x38] sm:$0xff] %vm1448, %v1447
        %v1457 = vpack.c.bf16 %v1322, %v1320
        %v1458 = vpack.c.bf16 %v1326, %v1324
        %v1459 = vpack.c.bf16 %v1330, %v1328
        %v1460 = vpack.c.bf16 %v1334, %v1332
        %v1461 = vld [vmem:[#allocation4] sm:$0xff]
        %v1462 = vld [vmem:[#allocation4 + $0x8] sm:$0xff]
        %1463 = vmatprep.subr.bf16.mxu0 0
        %1464 = vmatpush1.bf16.msra.mxu0 %v1081
        %1465 = vmatprep.subr.bf16.mxu0 0
        %1466 = vmatpush1.bf16.msra.mxu0 %v1080
        %1467 = vmatprep.subr.bf16.mxu0 0
        %1468 = vmatpush1.bf16.msra.mxu0 %v1079
        %1469 = vmatprep.subr.bf16.mxu0 0
        %1470 = vmatpush1.bf16.msra.mxu0 %v1078
        %1471 = vmatprep.subr.bf16.mxu0 0
        %1472 = vmatpush1.bf16.msra.mxu0 %v1077
        %1473 = vmatprep.subr.bf16.mxu0 0
        %1474 = vmatpush1.bf16.msra.mxu0 %v1076
        %1475 = vmatprep.subr.bf16.mxu0 0
        %1476 = vmatpush1.bf16.msra.mxu0 %v1075
        %1477 = vmatprep.subr.bf16.mxu0 0
        %1478 = vmatpush1.bf16.msra.mxu0 %v1074
        %1479 = vmatprep.subr.bf16.mxu0 0
        %1480 = vmatpush2.bf16.msra.mxu0 0
        %1481 = vmatprep.subr.bf16.mxu0 0
        %1482 = vmatpush2.bf16.msra.mxu0 0
        %1483 = vmatprep.subr.bf16.mxu0 0
        %1484 = vmatpush2.bf16.msra.mxu0 0
        %1485 = vmatprep.subr.bf16.mxu0 0
        %1486 = vmatpush2.bf16.msra.mxu0 0
        %1487 = vmatprep.subr.bf16.mxu0 0
        %1488 = vmatpush2.bf16.msra.mxu0 0
        %1489 = vmatprep.subr.bf16.mxu0 0
        %1490 = vmatpush2.bf16.msra.mxu0 0
        %1491 = vmatprep.subr.bf16.mxu0 0
        %1492 = vmatpush2.bf16.msra.mxu0 0
        %1493 = vmatprep.subr.bf16.mxu0 0
        %1494 = vmatpush2.bf16.msra.mxu0 0
        %1495 = vmatprep.mubr.bf16.mxu0 0
        %1496 = vmatmul.mubr.bf16.gmra.mxu0 %v1457
        %v1497 = vpop.f32.mrf.mxu0
        %v1498 = vadd.f32 0.0, %v1497
        %v1499 = vpop.f32.mrf.mxu0
        %v1500 = vpop.f32.mrf.mxu0
        %v1501 = vadd.f32 0.0, %v1500
        %v1502 = vpop.f32.mrf.mxu0
        %1503 = vdwg.mxu0
        %v1504 = vadd.f32 %v1461, %v1498
        %v1505 = vadd.f32 %v1462, %v1501
        %1506 = vst.msk [vmem:[#allocation4] sm:$0xff] %vm1448, %v1504
        %1507 = vst.msk [vmem:[#allocation4 + $0x8] sm:$0xff] %vm1448, %v1505
        %v1508 = vld [vmem:[#allocation4 + $0x10] sm:$0xff]
        %v1509 = vld [vmem:[#allocation4 + $0x18] sm:$0xff]
        %1518 = vrot.lane.b32.xlu0 %v1074, 112
        %v1519 = vpop.permute.xlu0 %1518
        %1520 = vrot.lane.b32.xlu0 %v1075, 112
        %v1521 = vpop.permute.xlu0 %1520
        %1522 = vrot.lane.b32.xlu0 %v1076, 112
        %v1523 = vpop.permute.xlu0 %1522
        %1524 = vrot.lane.b32.xlu0 %v1077, 112
        %v1525 = vpop.permute.xlu0 %1524
        %1526 = vrot.lane.b32.xlu0 %v1078, 112
        %v1527 = vpop.permute.xlu0 %1526
        %1528 = vrot.lane.b32.xlu0 %v1079, 112
        %v1529 = vpop.permute.xlu0 %1528
        %1530 = vrot.lane.b32.xlu0 %v1080, 112
        %v1531 = vpop.permute.xlu0 %1530
        %1532 = vrot.lane.b32.xlu0 %v1081, 112
        %v1533 = vpop.permute.xlu0 %1532
        %1542 = vmatprep.subr.bf16.mxu0 0
        %1543 = vmatpush1.bf16.msra.mxu0 %v1533
        %1544 = vmatprep.subr.bf16.mxu0 0
        %1545 = vmatpush1.bf16.msra.mxu0 %v1531
        %1546 = vmatprep.subr.bf16.mxu0 0
        %1547 = vmatpush1.bf16.msra.mxu0 %v1529
        %1548 = vmatprep.subr.bf16.mxu0 0
        %1549 = vmatpush1.bf16.msra.mxu0 %v1527
        %1550 = vmatprep.subr.bf16.mxu0 0
        %1551 = vmatpush1.bf16.msra.mxu0 %v1525
        %1552 = vmatprep.subr.bf16.mxu0 0
        %1553 = vmatpush1.bf16.msra.mxu0 %v1523
        %1554 = vmatprep.subr.bf16.mxu0 0
        %1555 = vmatpush1.bf16.msra.mxu0 %v1521
        %1556 = vmatprep.subr.bf16.mxu0 0
        %1557 = vmatpush1.bf16.msra.mxu0 %v1519
        %1558 = vmatprep.subr.bf16.mxu0 0
        %1559 = vmatpush2.bf16.msra.mxu0 0
        %1560 = vmatprep.subr.bf16.mxu0 0
        %1561 = vmatpush2.bf16.msra.mxu0 0
        %1562 = vmatprep.subr.bf16.mxu0 0
        %1563 = vmatpush2.bf16.msra.mxu0 0
        %1564 = vmatprep.subr.bf16.mxu0 0
        %1565 = vmatpush2.bf16.msra.mxu0 0
        %1566 = vmatprep.subr.bf16.mxu0 0
        %1567 = vmatpush2.bf16.msra.mxu0 0
        %1568 = vmatprep.subr.bf16.mxu0 0
        %1569 = vmatpush2.bf16.msra.mxu0 0
        %1570 = vmatprep.subr.bf16.mxu0 0
        %1571 = vmatpush2.bf16.msra.mxu0 0
        %1572 = vmatprep.subr.bf16.mxu0 0
        %1573 = vmatpush2.bf16.msra.mxu0 0
        %1574 = vmatprep.mubr.bf16.mxu0 0
        %1575 = vmatmul.mubr.bf16.gmra.mxu0 %v1458
        %v1576 = vpop.f32.mrf.mxu0
        %v1577 = vadd.f32 0.0, %v1576
        %v1578 = vpop.f32.mrf.mxu0
        %v1579 = vpop.f32.mrf.mxu0
        %v1580 = vadd.f32 0.0, %v1579
        %v1581 = vpop.f32.mrf.mxu0
        %1582 = vdwg.mxu0
        %v1583 = vadd.f32 %v1508, %v1577
        %v1584 = vadd.f32 %v1509, %v1580
        %1585 = vst.msk [vmem:[#allocation4 + $0x10] sm:$0xff] %vm1448, %v1583
        %1586 = vst.msk [vmem:[#allocation4 + $0x18] sm:$0xff] %vm1448, %v1584
        %v1587 = vld [vmem:[#allocation4 + $0x20] sm:$0xff]
        %v1588 = vld [vmem:[#allocation4 + $0x28] sm:$0xff]
        %1589 = vrot.lane.b32.xlu0 %v1074, 96
        %v1590 = vpop.permute.xlu0 %1589
        %1591 = vrot.lane.b32.xlu0 %v1075, 96
        %v1592 = vpop.permute.xlu0 %1591
        %1593 = vrot.lane.b32.xlu0 %v1076, 96
        %v1594 = vpop.permute.xlu0 %1593
        %1595 = vrot.lane.b32.xlu0 %v1077, 96
        %v1596 = vpop.permute.xlu0 %1595
        %1597 = vrot.lane.b32.xlu0 %v1078, 96
        %v1598 = vpop.permute.xlu0 %1597
        %1599 = vrot.lane.b32.xlu0 %v1079, 96
        %v1600 = vpop.permute.xlu0 %1599
        %1601 = vrot.lane.b32.xlu0 %v1080, 96
        %v1602 = vpop.permute.xlu0 %1601
        %1603 = vrot.lane.b32.xlu0 %v1081, 96
        %v1604 = vpop.permute.xlu0 %1603
        %1613 = vmatprep.subr.bf16.mxu0 0
        %1614 = vmatpush1.bf16.msra.mxu0 %v1604
        %1615 = vmatprep.subr.bf16.mxu0 0
        %1616 = vmatpush1.bf16.msra.mxu0 %v1602
        %1617 = vmatprep.subr.bf16.mxu0 0
        %1618 = vmatpush1.bf16.msra.mxu0 %v1600
        %1619 = vmatprep.subr.bf16.mxu0 0
        %1620 = vmatpush1.bf16.msra.mxu0 %v1598
        %1621 = vmatprep.subr.bf16.mxu0 0
        %1622 = vmatpush1.bf16.msra.mxu0 %v1596
        %1623 = vmatprep.subr.bf16.mxu0 0
        %1624 = vmatpush1.bf16.msra.mxu0 %v1594
        %1625 = vmatprep.subr.bf16.mxu0 0
        %1626 = vmatpush1.bf16.msra.mxu0 %v1592
        %1627 = vmatprep.subr.bf16.mxu0 0
        %1628 = vmatpush1.bf16.msra.mxu0 %v1590
        %1629 = vmatprep.subr.bf16.mxu0 0
        %1630 = vmatpush2.bf16.msra.mxu0 0
        %1631 = vmatprep.subr.bf16.mxu0 0
        %1632 = vmatpush2.bf16.msra.mxu0 0
        %1633 = vmatprep.subr.bf16.mxu0 0
        %1634 = vmatpush2.bf16.msra.mxu0 0
        %1635 = vmatprep.subr.bf16.mxu0 0
        %1636 = vmatpush2.bf16.msra.mxu0 0
        %1637 = vmatprep.subr.bf16.mxu0 0
        %1638 = vmatpush2.bf16.msra.mxu0 0
        %1639 = vmatprep.subr.bf16.mxu0 0
        %1640 = vmatpush2.bf16.msra.mxu0 0
        %1641 = vmatprep.subr.bf16.mxu0 0
        %1642 = vmatpush2.bf16.msra.mxu0 0
        %1643 = vmatprep.subr.bf16.mxu0 0
        %1644 = vmatpush2.bf16.msra.mxu0 0
        %1645 = vmatprep.mubr.bf16.mxu0 0
        %1646 = vmatmul.mubr.bf16.gmra.mxu0 %v1459
        %v1647 = vpop.f32.mrf.mxu0
        %v1648 = vadd.f32 0.0, %v1647
        %v1649 = vpop.f32.mrf.mxu0
        %v1650 = vpop.f32.mrf.mxu0
        %v1651 = vadd.f32 0.0, %v1650
        %v1652 = vpop.f32.mrf.mxu0
        %1653 = vdwg.mxu0
        %v1654 = vadd.f32 %v1587, %v1648
        %v1655 = vadd.f32 %v1588, %v1651
        %1656 = vst.msk [vmem:[#allocation4 + $0x20] sm:$0xff] %vm1448, %v1654
        %1657 = vst.msk [vmem:[#allocation4 + $0x28] sm:$0xff] %vm1448, %v1655
        %v1658 = vld [vmem:[#allocation4 + $0x30] sm:$0xff]
        %v1659 = vld [vmem:[#allocation4 + $0x38] sm:$0xff]
        %1660 = vrot.lane.b32.xlu0 %v1074, 80
        %v1661 = vpop.permute.xlu0 %1660
        %1662 = vrot.lane.b32.xlu0 %v1075, 80
        %v1663 = vpop.permute.xlu0 %1662
        %1664 = vrot.lane.b32.xlu0 %v1076, 80
        %v1665 = vpop.permute.xlu0 %1664
        %1666 = vrot.lane.b32.xlu0 %v1077, 80
        %v1667 = vpop.permute.xlu0 %1666
        %1668 = vrot.lane.b32.xlu0 %v1078, 80
        %v1669 = vpop.permute.xlu0 %1668
        %1670 = vrot.lane.b32.xlu0 %v1079, 80
        %v1671 = vpop.permute.xlu0 %1670
        %1672 = vrot.lane.b32.xlu0 %v1080, 80
        %v1673 = vpop.permute.xlu0 %1672
        %1674 = vrot.lane.b32.xlu0 %v1081, 80
        %v1675 = vpop.permute.xlu0 %1674
        %1684 = vmatprep.subr.bf16.mxu0 0
        %1685 = vmatpush1.bf16.msra.mxu0 %v1675
        %1686 = vmatprep.subr.bf16.mxu0 0
        %1687 = vmatpush1.bf16.msra.mxu0 %v1673
        %1688 = vmatprep.subr.bf16.mxu0 0
        %1689 = vmatpush1.bf16.msra.mxu0 %v1671
        %1690 = vmatprep.subr.bf16.mxu0 0
        %1691 = vmatpush1.bf16.msra.mxu0 %v1669
        %1692 = vmatprep.subr.bf16.mxu0 0
        %1693 = vmatpush1.bf16.msra.mxu0 %v1667
        %1694 = vmatprep.subr.bf16.mxu0 0
        %1695 = vmatpush1.bf16.msra.mxu0 %v1665
        %1696 = vmatprep.subr.bf16.mxu0 0
        %1697 = vmatpush1.bf16.msra.mxu0 %v1663
        %1698 = vmatprep.subr.bf16.mxu0 0
        %1699 = vmatpush1.bf16.msra.mxu0 %v1661
        %1700 = vmatprep.subr.bf16.mxu0 0
        %1701 = vmatpush2.bf16.msra.mxu0 0
        %1702 = vmatprep.subr.bf16.mxu0 0
        %1703 = vmatpush2.bf16.msra.mxu0 0
        %1704 = vmatprep.subr.bf16.mxu0 0
        %1705 = vmatpush2.bf16.msra.mxu0 0
        %1706 = vmatprep.subr.bf16.mxu0 0
        %1707 = vmatpush2.bf16.msra.mxu0 0
        %1708 = vmatprep.subr.bf16.mxu0 0
        %1709 = vmatpush2.bf16.msra.mxu0 0
        %1710 = vmatprep.subr.bf16.mxu0 0
        %1711 = vmatpush2.bf16.msra.mxu0 0
        %1712 = vmatprep.subr.bf16.mxu0 0
        %1713 = vmatpush2.bf16.msra.mxu0 0
        %1714 = vmatprep.subr.bf16.mxu0 0
        %1715 = vmatpush2.bf16.msra.mxu0 0
        %1716 = vmatprep.mubr.bf16.mxu0 0
        %1717 = vmatmul.mubr.bf16.gmra.mxu0 %v1460
        %v1718 = vpop.f32.mrf.mxu0
        %v1719 = vadd.f32 0.0, %v1718
        %v1720 = vpop.f32.mrf.mxu0
        %v1721 = vpop.f32.mrf.mxu0
        %v1722 = vadd.f32 0.0, %v1721
        %v1723 = vpop.f32.mrf.mxu0
        %1724 = vdwg.mxu0
        %v1725 = vadd.f32 %v1658, %v1719
        %v1726 = vadd.f32 %v1659, %v1722
        %1727 = vst.msk [vmem:[#allocation4 + $0x30] sm:$0xff] %vm1448, %v1725
        %1728 = vst.msk [vmem:[#allocation4 + $0x38] sm:$0xff] %vm1448, %v1726
        %p1729 = scmp.eq.s32.totalorder %s24, 1
        // Predicated region
        $region98: #{tpu_custom_call.1} parent=88 // pred_check
          %p1730 = pneg %p1729
        $region99: #{tpu_custom_call.1} parent=88 // pred_check_branch
          %1732 = sbr.rel (%p1730) target = $region101
        $region100: #{tpu_custom_call.1} parent=88 // pred_region
          %v1733 = vld [vmem:[#allocation3] sm:$0xff]
          %v1734 = vld [vmem:[#allocation3 + $0x8] sm:$0xff]
          %v1735 = vld [vmem:[#allocation3 + $0x10] sm:$0xff]
          %v1736 = vld [vmem:[#allocation3 + $0x18] sm:$0xff]
          %v1737 = vld [vmem:[#allocation3 + $0x20] sm:$0xff]
          %v1738 = vld [vmem:[#allocation3 + $0x28] sm:$0xff]
          %v1739 = vld [vmem:[#allocation3 + $0x30] sm:$0xff]
          %v1740 = vld [vmem:[#allocation3 + $0x38] sm:$0xff]
          %v1741 = vrcp.pop %v1733
          %v1742 = vrcp.pop %v1734
          %v1743 = vrcp.pop %v1735
          %v1744 = vrcp.pop %v1736
          %v1745 = vrcp.pop %v1737
          %v1746 = vrcp.pop %v1738
          %v1747 = vrcp.pop %v1739
          %v1748 = vrcp.pop %v1740
          %v1749 = vld [vmem:[#allocation4] sm:$0xff]
          %v1750 = vld [vmem:[#allocation4 + $0x8] sm:$0xff]
          %v1751 = vld [vmem:[#allocation4 + $0x10] sm:$0xff]
          %v1752 = vld [vmem:[#allocation4 + $0x18] sm:$0xff]
          %v1753 = vld [vmem:[#allocation4 + $0x20] sm:$0xff]
          %v1754 = vld [vmem:[#allocation4 + $0x28] sm:$0xff]
          %v1755 = vld [vmem:[#allocation4 + $0x30] sm:$0xff]
          %v1756 = vld [vmem:[#allocation4 + $0x38] sm:$0xff]
          %1758 = vset.pattern.permute.xlu0 0
          %1759 = vperm.xlu0 %1758, %v1741
          %v1760 = vpop.permute.xlu0 %1759
          %1763 = vset.pattern.permute.xlu0 0
          %1764 = vperm.xlu0 %1763, %v1742
          %v1765 = vpop.permute.xlu0 %1764
          %1768 = vset.pattern.permute.xlu0 0
          %1769 = vperm.xlu0 %1768, %v1743
          %v1770 = vpop.permute.xlu0 %1769
          %1773 = vset.pattern.permute.xlu0 0
          %1774 = vperm.xlu0 %1773, %v1744
          %v1775 = vpop.permute.xlu0 %1774
          %1778 = vset.pattern.permute.xlu0 0
          %1779 = vperm.xlu0 %1778, %v1745
          %v1780 = vpop.permute.xlu0 %1779
          %1783 = vset.pattern.permute.xlu0 0
          %1784 = vperm.xlu0 %1783, %v1746
          %v1785 = vpop.permute.xlu0 %1784
          %1788 = vset.pattern.permute.xlu0 0
          %1789 = vperm.xlu0 %1788, %v1747
          %v1790 = vpop.permute.xlu0 %1789
          %1793 = vset.pattern.permute.xlu0 0
          %1794 = vperm.xlu0 %1793, %v1748
          %v1795 = vpop.permute.xlu0 %1794
          %v1797 = vmul.f32 %v1749, %v1760
          %v1798 = vmul.f32 %v1750, %v1765
          %v1799 = vmul.f32 %v1751, %v1770
          %v1800 = vmul.f32 %v1752, %v1775
          %v1801 = vmul.f32 %v1753, %v1780
          %v1802 = vmul.f32 %v1754, %v1785
          %v1803 = vmul.f32 %v1755, %v1790
          %v1804 = vmul.f32 %v1756, %v1795
          %1805 = vst.msk [vmem:[%s460] sm:$0xff] %vm1448, %v1797
          %1806 = vst.msk [vmem:[%s460 + $0x8] sm:$0xff] %vm1448, %v1798
          %1807 = vst.msk [vmem:[%s460 + $0x10] sm:$0xff] %vm1448, %v1799
          %1808 = vst.msk [vmem:[%s460 + $0x18] sm:$0xff] %vm1448, %v1800
          %1809 = vst.msk [vmem:[%s460 + $0x20] sm:$0xff] %vm1448, %v1801
          %1810 = vst.msk [vmem:[%s460 + $0x28] sm:$0xff] %vm1448, %v1802
          %1811 = vst.msk [vmem:[%s460 + $0x30] sm:$0xff] %vm1448, %v1803
          %1812 = vst.msk [vmem:[%s460 + $0x38] sm:$0xff] %vm1448, %v1804
        $region101: #{tpu_custom_call.1} parent=88 // pred_fallthru
          _
        %p1813 = scmp.lt.s32.totalorder %s23, 1
        %s1814 = scalar_select %p1813, %s23, 1
        %s1815 = smul.addr %s1814, 8
        %s1816 = smul.addr %s1815, 8
        %s1817 = scalar_lea.vmem %s8, %s1816
        // Predicated region
        $region102: #{tpu_custom_call.1} parent=88 // pred_check
          %p1818 = pneg %p243
        $region103: #{tpu_custom_call.1} parent=88 // pred_check_branch
          %1820 = sbr.rel (%p1818) target = $region105
        $region104: #{tpu_custom_call.1} parent=88 // pred_region
          _
        $region105: #{tpu_custom_call.1} parent=88 // pred_fallthru
          _
      $region89: #{tpu_custom_call.1} parent=5 // pred_fallthru
        _
      %p1821 = scmp.le.s32.totalorder 2, %s14
      // Predicated region
      $region106: #{tpu_custom_call.1} parent=5 // pred_check
        %p1822 = pneg %p1821
      $region107: #{tpu_custom_call.1} parent=5 // pred_check_branch
        %1824 = sbr.rel (%p1822) target = $region109
      $region108: #{tpu_custom_call.1} parent=5 // pred_region
        %s1825 = ssub.s32 %s14, 2
        // Predicated region
        $region110: #{tpu_custom_call.1} parent=108 // pred_check
          %p1826 = pneg %p249
        $region111: #{tpu_custom_call.1} parent=108 // pred_check_branch
          %1828 = sbr.rel (%p1826) target = $region113
        $region112: #{tpu_custom_call.1} parent=108 // pred_region
          %p1829 = scmp.lt.s32.totalorder %s25, 1
          %s1830 = scalar_select %p1829, %s25, 1
          %s1831 = smul.addr %s1830, 8
          %s1832 = smul.addr %s1831, 8
          %s1833 = scalar_lea.vmem %s8, %s1832
        $region113: #{tpu_custom_call.1} parent=108 // pred_fallthru
          _
      $region109: #{tpu_custom_call.1} parent=5 // pred_fallthru
        _
    $region6: #{tpu_custom_call.1} parent=1 // loop_footer
      %s18 = sadd.s32 1, %s14
    $region7: #{tpu_custom_call.1} parent=1 // loop_footer_branch
      %13 = sbr.rel target = $region3
    $region8: #{tpu_custom_call.1} parent=1 // loop_exit
      _

</llo_original>
